<compile_context>
chip_gen: v6e
topology: v6e:2x2x1
jax: 0.10.0
libtpu: 0.0.40
codegen_flags: <defaults>
</compile_context>

<pallas_src>
import jax
import jax.numpy as jnp
import numpy as np
from jax.experimental import pallas as pl
from jax.experimental.pallas import tpu as pltpu


# ----------------------------- Pallas kernel --------------------------------

def up_nocat_kernel(x_ref, uh_ref, mw_ref, sdn_ref, sup_ref,
                    b1_ref, b2_ref,
                    bn1s_ref, bn1b_ref, bn2s_ref, bn2b_ref,
                    rsum_ref, rexp_ref,
                    pw1_ref, seb1_ref, w2b_ref, seb2_ref,
                    o_ref):
    f32 = jnp.float32

    # ---- fused bilinear x2 upsample (align_corners=True) as two matmuls ----
    #   rows: (B*H2, B*H) @ (B*H, W*C) ; cols: (B*H2, W*C) @ (W*C, W2*C)
    xr = jnp.dot(uh_ref[...], x_ref[...], preferred_element_type=f32)
    xu = jnp.dot(xr, mw_ref[...], preferred_element_type=f32)          # (B*H2, W2*C)

    # ---- BN1 (inference affine) + ReLU, lane-dense ----
    t1 = jnp.maximum(xu * bn1s_ref[...] + bn1b_ref[...], 0.0)

    # ---- 3x3 'same' conv as 3 banded matmuls (one per kernel row) ----
    def conv3x3(t, b_ref):
        t_m1 = jnp.dot(sdn_ref[...], t, preferred_element_type=f32)    # t[h-1] (zero-filled)
        t_p1 = jnp.dot(sup_ref[...], t, preferred_element_type=f32)    # t[h+1] (zero-filled)
        acc = jnp.dot(t_m1, b_ref[0], preferred_element_type=f32)
        acc = acc + jnp.dot(t, b_ref[1], preferred_element_type=f32)
        acc = acc + jnp.dot(t_p1, b_ref[2], preferred_element_type=f32)
        return acc                                                      # (B*H2, W2*C)

    c1 = conv3x3(t1, b1_ref)
    t2 = jnp.maximum(c1 * bn2s_ref[...] + bn2b_ref[...], 0.0)
    c2 = conv3x3(t2, b2_ref)

    # ---- SE: per-batch global avg pool -> 1x1 -> ReLU -> 1x1 -> sigmoid ----
    s = jnp.dot(rsum_ref[...], c2, preferred_element_type=f32)          # (B, W2*C) per-batch sums over h
    h = jnp.maximum(jnp.dot(s, pw1_ref[...], preferred_element_type=f32)
                    + seb1_ref[...], 0.0)                               # (B, Cr)
    g = jnp.dot(h, w2b_ref[...], preferred_element_type=f32) + seb2_ref[...]   # (B, W2*C)
    gate = pl.reciprocal(1.0 + jnp.exp(-g))                             # sigmoid
    gate_rows = jnp.dot(rexp_ref[...], gate, preferred_element_type=f32)       # (B*H2, W2*C)

    # ---- SE scale + identity shortcut (stride == 1, inplanes == planes) ----
    o_ref[...] = (c2 * gate_rows + xu).astype(o_ref.dtype)


# ----------------------------- wrapper-side matrix builders ------------------

def _upsample_matrix(n_in, n_out):
    """(n_out, n_in) linear-interp matrix, align_corners=True."""
    if n_in == 1:
        return jnp.ones((n_out, 1), jnp.float32)
    src = jnp.arange(n_out, dtype=jnp.float32) * (n_in - 1) / (n_out - 1)
    i0 = jnp.floor(src).astype(jnp.int32)
    i1 = jnp.minimum(i0 + 1, n_in - 1)
    a = src - i0.astype(jnp.float32)
    U = jnp.zeros((n_out, n_in), jnp.float32)
    U = U.at[jnp.arange(n_out), i0].add(1.0 - a)
    U = U.at[jnp.arange(n_out), i1].add(a)
    return U


def _band_matrices(w_hwio, w_out):
    """(3, W*Cin, W*Cout): per-kernel-row banded matrices so that a 3x3 'same'
    conv along W becomes a dense (rows, W*Cin) @ (W*Cin, W*Cout) matmul."""
    _, _, cin, cout = w_hwio.shape
    wi = jnp.arange(w_out)[:, None]
    wo = jnp.arange(w_out)[None, :]
    kw = wi - wo + 1                                   # tap index along W
    valid = (kw >= 0) & (kw <= 2)
    kwc = jnp.clip(kw, 0, 2)
    mats = []
    for kh in range(3):
        blocks = w_hwio[kh][kwc]                       # (W, W, Cin, Cout)
        blocks = jnp.where(valid[:, :, None, None], blocks, 0.0)
        mats.append(blocks.transpose(0, 2, 1, 3).reshape(w_out * cin, w_out * cout))
    return jnp.stack(mats)


def _shift_matrices(h2):
    eye = jnp.eye(h2, dtype=jnp.float32)
    s_dn = jnp.concatenate([jnp.zeros((1, h2), jnp.float32), eye[:-1]], axis=0)  # t[h-1]
    s_up = jnp.concatenate([eye[1:], jnp.zeros((1, h2), jnp.float32)], axis=0)   # t[h+1]
    return s_dn, s_up


# ----------------------------- JAX glue --------------------------------------

def up_nocat_forward(x_nchw, p, *, b_tile=None):
    N, C, H, W = x_nchw.shape
    H2, W2 = 2 * H, 2 * W
    WC, W2C = W * C, W2 * C
    Cr = p["se_w1"].shape[1]

    if b_tile is None:
        b_tile = min(N, 8)
        while N % b_tile:
            b_tile -= 1
    assert N % b_tile == 0

    # lane-dense activation layout: rows = n*H + h, lanes = w*C + c
    x_rows = jnp.transpose(x_nchw, (0, 2, 3, 1)).reshape(N * H, WC).astype(jnp.float32)

    # BN folded to inference-mode affine, tiled along lanes (index w*C + c -> c)
    eps = 1e-5
    s1 = p["bn1_gamma"] / jnp.sqrt(p["bn1_var"] + eps)
    b1 = p["bn1_beta"] - p["bn1_mean"] * s1
    s2 = p["bn2_gamma"] / jnp.sqrt(p["bn2_var"] + eps)
    b2 = p["bn2_beta"] - p["bn2_mean"] * s2
    bn1s = jnp.tile(s1, W2).reshape(1, W2C)
    bn1b = jnp.tile(b1, W2).reshape(1, W2C)
    bn2s = jnp.tile(s2, W2).reshape(1, W2C)
    bn2b = jnp.tile(b2, W2).reshape(1, W2C)

    eye_b = jnp.eye(b_tile, dtype=jnp.float32)
    eye_c = jnp.eye(C, dtype=jnp.float32)

    # upsample matrices (block-diagonal over the batch fold for rows)
    Uh = jnp.kron(eye_b, _upsample_matrix(H, H2))                    # (b*H2, b*H)
    Mw = jnp.kron(_upsample_matrix(W, W2).T, eye_c)                  # (W*C, W2*C)

    # row-shift matrices for the conv H taps (block-diagonal: no cross-batch leak)
    s_dn, s_up = _shift_matrices(H2)
    Sdn = jnp.kron(eye_b, s_dn)                                      # (b*H2, b*H2)
    Sup = jnp.kron(eye_b, s_up)

    # banded conv weights (built once from the (3,3,C,C) HWIO tensors)
    B1 = _band_matrices(p["w1"], W2)                                 # (3, W2*C, W2*C)
    B2 = _band_matrices(p["w2"], W2)

    # SE helpers: per-batch pooling / broadcast as matmuls, 1x1 convs folded in
    Rsum = jnp.kron(eye_b, jnp.ones((1, H2), jnp.float32))           # (b, b*H2)
    Rexp = jnp.kron(eye_b, jnp.ones((H2, 1), jnp.float32))           # (b*H2, b)
    pool = jnp.tile(eye_c, (W2, 1)) / float(H2 * W2)                 # (W2*C, C)
    PW1 = pool @ p["se_w1"]                                          # (W2*C, Cr)
    bcast = jnp.tile(eye_c, (1, W2))                                 # (C, W2*C)
    W2B = p["se_w2"] @ bcast                                         # (Cr, W2*C)
    seb1 = p["se_b1"].reshape(1, Cr)
    seb2t = jnp.tile(p["se_b2"], W2).reshape(1, W2C)

    rows_in = b_tile * H
    rows_out = b_tile * H2

    def full_spec(arr):
        nd = arr.ndim
        return pl.BlockSpec(arr.shape, lambda i, _n=nd: (0,) * _n)

    in_arrays = [Uh, Mw, Sdn, Sup, B1, B2, bn1s, bn1b, bn2s, bn2b,
                 Rsum, Rexp, PW1, seb1, W2B, seb2t]
    in_specs = ([pl.BlockSpec((rows_in, WC), lambda i: (i, 0))]
                + [full_spec(a) for a in in_arrays])

    out2d = pl.pallas_call(
        up_nocat_kernel,
        out_shape=jax.ShapeDtypeStruct((N * H2, W2C), jnp.float32),
        grid_spec=pltpu.PrefetchScalarGridSpec(
            num_scalar_prefetch=0,
            grid=(N // b_tile,),
            in_specs=in_specs,
            out_specs=pl.BlockSpec((rows_out, W2C), lambda i: (i, 0)),
        ),
        compiler_params=pltpu.CompilerParams(
            dimension_semantics=("parallel",)),   # independent batch tiles (2 TCs on v7x)
    )(x_rows, *in_arrays)

    out = out2d.reshape(N, H2, W2, C)
    return jnp.transpose(out, (0, 3, 1, 2))       # back to NCHW


# ----------------------------- pure-JAX reference ----------------------------

def _upsample2x_bilinear_ac(x_nchw):
    N, C, H, W = x_nchw.shape
    Ho, Wo = 2 * H, 2 * W
    hs = jnp.arange(Ho, dtype=jnp.float32) * (H - 1) / (Ho - 1)
    ws = jnp.arange(Wo, dtype=jnp.float32) * (W - 1) / (Wo - 1)
    h0 = jnp.floor(hs).astype(jnp.int32); h1 = jnp.minimum(h0 + 1, H - 1)
    ah = hs - h0.astype(jnp.float32)
    w0 = jnp.floor(ws).astype(jnp.int32); w1 = jnp.minimum(w0 + 1, W - 1)
    aw = ws - w0.astype(jnp.float32)
    x00 = x_nchw[:, :, h0][:, :, :, w0]; x01 = x_nchw[:, :, h0][:, :, :, w1]
    x10 = x_nchw[:, :, h1][:, :, :, w0]; x11 = x_nchw[:, :, h1][:, :, :, w1]
    ah = ah[None, None, :, None]; aw = aw[None, None, None, :]
    return (x00 * (1 - ah) * (1 - aw) + x01 * (1 - ah) * aw
            + x10 * ah * (1 - aw) + x11 * ah * aw)


def _ref_forward(x_nchw, p):
    xu = _upsample2x_bilinear_ac(x_nchw)
    xn = jnp.transpose(xu, (0, 2, 3, 1))
    eps = 1e-5
    s1 = p["bn1_gamma"] / jnp.sqrt(p["bn1_var"] + eps)
    b1 = p["bn1_beta"] - p["bn1_mean"] * s1
    s2 = p["bn2_gamma"] / jnp.sqrt(p["bn2_var"] + eps)
    b2 = p["bn2_beta"] - p["bn2_mean"] * s2
    t1 = jax.nn.relu(xn * s1 + b1)
    c1 = jax.lax.conv_general_dilated(t1, p["w1"], (1, 1), ((1, 1), (1, 1)),
                                      dimension_numbers=("NHWC", "HWIO", "NHWC"))
    t2 = jax.nn.relu(c1 * s2 + b2)
    c2 = jax.lax.conv_general_dilated(t2, p["w2"], (1, 1), ((1, 1), (1, 1)),
                                      dimension_numbers=("NHWC", "HWIO", "NHWC"))
    pooled = jnp.mean(c2, axis=(1, 2), keepdims=True)
    h = jax.nn.relu(jnp.einsum("nhwc,cd->nhwd", pooled, p["se_w1"]) + p["se_b1"])
    g = jax.nn.sigmoid(jnp.einsum("nhwc,cd->nhwd", h, p["se_w2"]) + p["se_b2"])
    out = c2 * g + xn
    return jnp.transpose(out, (0, 3, 1, 2))


# ----------------------------- main -------------------------------------------

if __name__ == "__main__":
    key = jax.random.PRNGKey(0)
    ks = jax.random.split(key, 16)

    N, C, H, W = 2, 8, 8, 8       # up_nocat(in_ch, out_ch=C); input already has out_ch channels
    Cr = C // 2                    # SELayer reduction=2 (up_nocat default)

    x = jax.random.normal(ks[0], (N, C, H, W), jnp.float32)

    params = dict(
        w1=0.1 * jax.random.normal(ks[1], (3, 3, C, C), jnp.float32),
        w2=0.1 * jax.random.normal(ks[2], (3, 3, C, C), jnp.float32),
        bn1_gamma=1.0 + 0.1 * jax.random.normal(ks[3], (C,), jnp.float32),
        bn1_beta=0.1 * jax.random.normal(ks[4], (C,), jnp.float32),
        bn1_mean=0.1 * jax.random.normal(ks[5], (C,), jnp.float32),
        bn1_var=jax.random.uniform(ks[6], (C,), jnp.float32, 0.5, 1.5),
        bn2_gamma=1.0 + 0.1 * jax.random.normal(ks[7], (C,), jnp.float32),
        bn2_beta=0.1 * jax.random.normal(ks[8], (C,), jnp.float32),
        bn2_mean=0.1 * jax.random.normal(ks[9], (C,), jnp.float32),
        bn2_var=jax.random.uniform(ks[10], (C,), jnp.float32, 0.5, 1.5),
        se_w1=0.1 * jax.random.normal(ks[11], (C, Cr), jnp.float32),
        se_b1=0.1 * jax.random.normal(ks[12], (Cr,), jnp.float32),
        se_w2=0.1 * jax.random.normal(ks[13], (Cr, C), jnp.float32),
        se_b2=0.1 * jax.random.normal(ks[14], (C,), jnp.float32),
    )

    out = up_nocat_forward(x, params)
    jax.block_until_ready(out)
    assert out.shape == (N, C, 2 * H, 2 * W)

    ref = _ref_forward(x, params)
    np.testing.assert_allclose(np.asarray(out), np.asarray(ref),
                               rtol=5e-4, atol=5e-4)
    print("KERNEL_OK")
</pallas_src>

<mosaic_0001>
module attributes {stable_mosaic.version = 11 : i64} {
  func.func @up_nocat_kernel(%arg0: i32, %arg1: memref<16x64xf32, #tpu.memory_space<vmem>>, %arg2: memref<32x16xf32, #tpu.memory_space<vmem>>, %arg3: memref<64x128xf32, #tpu.memory_space<vmem>>, %arg4: memref<32x32xf32, #tpu.memory_space<vmem>>, %arg5: memref<32x32xf32, #tpu.memory_space<vmem>>, %arg6: memref<3x128x128xf32, #tpu.memory_space<vmem>>, %arg7: memref<3x128x128xf32, #tpu.memory_space<vmem>>, %arg8: memref<1x128xf32, #tpu.memory_space<vmem>>, %arg9: memref<1x128xf32, #tpu.memory_space<vmem>>, %arg10: memref<1x128xf32, #tpu.memory_space<vmem>>, %arg11: memref<1x128xf32, #tpu.memory_space<vmem>>, %arg12: memref<2x32xf32, #tpu.memory_space<vmem>>, %arg13: memref<32x2xf32, #tpu.memory_space<vmem>>, %arg14: memref<128x4xf32, #tpu.memory_space<vmem>>, %arg15: memref<1x4xf32, #tpu.memory_space<vmem>>, %arg16: memref<4x128xf32, #tpu.memory_space<vmem>>, %arg17: memref<1x128xf32, #tpu.memory_space<vmem>>, %arg18: memref<32x128xf32, #tpu.memory_space<vmem>>) attributes {dimension_semantics = [#tpu.dimension_semantics<parallel>], iteration_bounds = array<i64: 1>, scalar_prefetch = 0 : i64, scratch_operands = 0 : i64, tpu.core_type = #tpu.core_type<tc>, window_params = [{transform_indices = @transform_0, window_bounds = array<i64: 16, 64>}, {pipeline_mode = #tpu.pipeline_mode<synchronous>, transform_indices = @transform_1, window_bounds = array<i64: 32, 16>}, {pipeline_mode = #tpu.pipeline_mode<synchronous>, transform_indices = @transform_2, window_bounds = array<i64: 64, 128>}, {pipeline_mode = #tpu.pipeline_mode<synchronous>, transform_indices = @transform_3, window_bounds = array<i64: 32, 32>}, {pipeline_mode = #tpu.pipeline_mode<synchronous>, transform_indices = @transform_4, window_bounds = array<i64: 32, 32>}, {pipeline_mode = #tpu.pipeline_mode<synchronous>, transform_indices = @transform_5, window_bounds = array<i64: 3, 128, 128>}, {pipeline_mode = #tpu.pipeline_mode<synchronous>, transform_indices = @transform_6, window_bounds = array<i64: 3, 128, 128>}, {pipeline_mode = #tpu.pipeline_mode<synchronous>, transform_indices = @transform_7, window_bounds = array<i64: 1, 128>}, {pipeline_mode = #tpu.pipeline_mode<synchronous>, transform_indices = @transform_8, window_bounds = array<i64: 1, 128>}, {pipeline_mode = #tpu.pipeline_mode<synchronous>, transform_indices = @transform_9, window_bounds = array<i64: 1, 128>}, {pipeline_mode = #tpu.pipeline_mode<synchronous>, transform_indices = @transform_10, window_bounds = array<i64: 1, 128>}, {pipeline_mode = #tpu.pipeline_mode<synchronous>, transform_indices = @transform_11, window_bounds = array<i64: 2, 32>}, {pipeline_mode = #tpu.pipeline_mode<synchronous>, transform_indices = @transform_12, window_bounds = array<i64: 32, 2>}, {pipeline_mode = #tpu.pipeline_mode<synchronous>, transform_indices = @transform_13, window_bounds = array<i64: 128, 4>}, {pipeline_mode = #tpu.pipeline_mode<synchronous>, transform_indices = @transform_14, window_bounds = array<i64: 1, 4>}, {pipeline_mode = #tpu.pipeline_mode<synchronous>, transform_indices = @transform_15, window_bounds = array<i64: 4, 128>}, {pipeline_mode = #tpu.pipeline_mode<synchronous>, transform_indices = @transform_16, window_bounds = array<i64: 1, 128>}, {transform_indices = @transform_17, window_bounds = array<i64: 32, 128>}]} {
    %c0 = arith.constant 0 : index
    %c0_0 = arith.constant 0 : index
    %0 = vector.load %arg2[%c0, %c0_0] : memref<32x16xf32, #tpu.memory_space<vmem>>, vector<32x16xf32>
    %c0_1 = arith.constant 0 : index
    %c0_2 = arith.constant 0 : index
    %1 = vector.load %arg1[%c0_1, %c0_2] : memref<16x64xf32, #tpu.memory_space<vmem>>, vector<16x64xf32>
    %cst = arith.constant dense<0.000000e+00> : vector<32x64xf32>
    %2 = tpu.matmul %0, %1, %cst {dimension_numbers = #tpu.dot_dimension_numbers<[1], [0], [0], [1], [0, 0, 1, 1], [], []>} : vector<32x16xf32>, vector<16x64xf32>, vector<32x64xf32> -> vector<32x64xf32>
    %c0_3 = arith.constant 0 : index
    %c0_4 = arith.constant 0 : index
    %3 = vector.load %arg3[%c0_3, %c0_4] : memref<64x128xf32, #tpu.memory_space<vmem>>, vector<64x128xf32>
    %cst_5 = arith.constant dense<0.000000e+00> : vector<32x128xf32>
    %4 = tpu.matmul %2, %3, %cst_5 {dimension_numbers = #tpu.dot_dimension_numbers<[1], [0], [0], [1], [0, 0, 1, 1], [], []>} : vector<32x64xf32>, vector<64x128xf32>, vector<32x128xf32> -> vector<32x128xf32>
    %c0_6 = arith.constant 0 : index
    %c0_7 = arith.constant 0 : index
    %5 = vector.load %arg8[%c0_6, %c0_7] : memref<1x128xf32, #tpu.memory_space<vmem>>, vector<1x128xf32>
    %6 = vector.broadcast %5 : vector<1x128xf32> to vector<32x128xf32>
    %7 = arith.mulf %4, %6 : vector<32x128xf32>
    %c0_8 = arith.constant 0 : index
    %c0_9 = arith.constant 0 : index
    %8 = vector.load %arg9[%c0_8, %c0_9] : memref<1x128xf32, #tpu.memory_space<vmem>>, vector<1x128xf32>
    %9 = vector.broadcast %8 : vector<1x128xf32> to vector<32x128xf32>
    %10 = arith.addf %7, %9 : vector<32x128xf32>
    %cst_10 = arith.constant 0.000000e+00 : f32
    %11 = vector.broadcast %cst_10 : f32 to vector<32x128xf32>
    %12 = arith.maximumf %10, %11 : vector<32x128xf32>
    %c0_11 = arith.constant 0 : index
    %c0_12 = arith.constant 0 : index
    %13 = vector.load %arg4[%c0_11, %c0_12] : memref<32x32xf32, #tpu.memory_space<vmem>>, vector<32x32xf32>
    %cst_13 = arith.constant dense<0.000000e+00> : vector<32x128xf32>
    %14 = tpu.matmul %13, %12, %cst_13 {dimension_numbers = #tpu.dot_dimension_numbers<[1], [0], [0], [1], [0, 0, 1, 1], [], []>} : vector<32x32xf32>, vector<32x128xf32>, vector<32x128xf32> -> vector<32x128xf32>
    %c0_14 = arith.constant 0 : index
    %c0_15 = arith.constant 0 : index
    %15 = vector.load %arg5[%c0_14, %c0_15] : memref<32x32xf32, #tpu.memory_space<vmem>>, vector<32x32xf32>
    %cst_16 = arith.constant dense<0.000000e+00> : vector<32x128xf32>
    %16 = tpu.matmul %15, %12, %cst_16 {dimension_numbers = #tpu.dot_dimension_numbers<[1], [0], [0], [1], [0, 0, 1, 1], [], []>} : vector<32x32xf32>, vector<32x128xf32>, vector<32x128xf32> -> vector<32x128xf32>
    %c0_17 = arith.constant 0 : index
    %c0_18 = arith.constant 0 : index
    %c0_19 = arith.constant 0 : index
    %17 = vector.load %arg6[%c0_17, %c0_18, %c0_19] : memref<3x128x128xf32, #tpu.memory_space<vmem>>, vector<1x128x128xf32>
    %18 = vector.shape_cast %17 : vector<1x128x128xf32> to vector<128x128xf32>
    %cst_20 = arith.constant dense<0.000000e+00> : vector<32x128xf32>
    %19 = tpu.matmul %14, %18, %cst_20 {dimension_numbers = #tpu.dot_dimension_numbers<[1], [0], [0], [1], [0, 0, 1, 1], [], []>} : vector<32x128xf32>, vector<128x128xf32>, vector<32x128xf32> -> vector<32x128xf32>
    %c1 = arith.constant 1 : index
    %c0_21 = arith.constant 0 : index
    %c0_22 = arith.constant 0 : index
    %20 = vector.load %arg6[%c1, %c0_21, %c0_22] : memref<3x128x128xf32, #tpu.memory_space<vmem>>, vector<1x128x128xf32>
    %21 = vector.shape_cast %20 : vector<1x128x128xf32> to vector<128x128xf32>
    %cst_23 = arith.constant dense<0.000000e+00> : vector<32x128xf32>
    %22 = tpu.matmul %12, %21, %cst_23 {dimension_numbers = #tpu.dot_dimension_numbers<[1], [0], [0], [1], [0, 0, 1, 1], [], []>} : vector<32x128xf32>, vector<128x128xf32>, vector<32x128xf32> -> vector<32x128xf32>
    %23 = arith.addf %19, %22 : vector<32x128xf32>
    %c2 = arith.constant 2 : index
    %c0_24 = arith.constant 0 : index
    %c0_25 = arith.constant 0 : index
    %24 = vector.load %arg6[%c2, %c0_24, %c0_25] : memref<3x128x128xf32, #tpu.memory_space<vmem>>, vector<1x128x128xf32>
    %25 = vector.shape_cast %24 : vector<1x128x128xf32> to vector<128x128xf32>
    %cst_26 = arith.constant dense<0.000000e+00> : vector<32x128xf32>
    %26 = tpu.matmul %16, %25, %cst_26 {dimension_numbers = #tpu.dot_dimension_numbers<[1], [0], [0], [1], [0, 0, 1, 1], [], []>} : vector<32x128xf32>, vector<128x128xf32>, vector<32x128xf32> -> vector<32x128xf32>
    %27 = arith.addf %23, %26 : vector<32x128xf32>
    %c0_27 = arith.constant 0 : index
    %c0_28 = arith.constant 0 : index
    %28 = vector.load %arg10[%c0_27, %c0_28] : memref<1x128xf32, #tpu.memory_space<vmem>>, vector<1x128xf32>
    %29 = vector.broadcast %28 : vector<1x128xf32> to vector<32x128xf32>
    %30 = arith.mulf %27, %29 : vector<32x128xf32>
    %c0_29 = arith.constant 0 : index
    %c0_30 = arith.constant 0 : index
    %31 = vector.load %arg11[%c0_29, %c0_30] : memref<1x128xf32, #tpu.memory_space<vmem>>, vector<1x128xf32>
    %32 = vector.broadcast %31 : vector<1x128xf32> to vector<32x128xf32>
    %33 = arith.addf %30, %32 : vector<32x128xf32>
    %cst_31 = arith.constant 0.000000e+00 : f32
    %34 = vector.broadcast %cst_31 : f32 to vector<32x128xf32>
    %35 = arith.maximumf %33, %34 : vector<32x128xf32>
    %c0_32 = arith.constant 0 : index
    %c0_33 = arith.constant 0 : index
    %36 = vector.load %arg4[%c0_32, %c0_33] : memref<32x32xf32, #tpu.memory_space<vmem>>, vector<32x32xf32>
    %cst_34 = arith.constant dense<0.000000e+00> : vector<32x128xf32>
    %37 = tpu.matmul %36, %35, %cst_34 {dimension_numbers = #tpu.dot_dimension_numbers<[1], [0], [0], [1], [0, 0, 1, 1], [], []>} : vector<32x32xf32>, vector<32x128xf32>, vector<32x128xf32> -> vector<32x128xf32>
    %c0_35 = arith.constant 0 : index
    %c0_36 = arith.constant 0 : index
    %38 = vector.load %arg5[%c0_35, %c0_36] : memref<32x32xf32, #tpu.memory_space<vmem>>, vector<32x32xf32>
    %cst_37 = arith.constant dense<0.000000e+00> : vector<32x128xf32>
    %39 = tpu.matmul %38, %35, %cst_37 {dimension_numbers = #tpu.dot_dimension_numbers<[1], [0], [0], [1], [0, 0, 1, 1], [], []>} : vector<32x32xf32>, vector<32x128xf32>, vector<32x128xf32> -> vector<32x128xf32>
    %c0_38 = arith.constant 0 : index
    %c0_39 = arith.constant 0 : index
    %c0_40 = arith.constant 0 : index
    %40 = vector.load %arg7[%c0_38, %c0_39, %c0_40] : memref<3x128x128xf32, #tpu.memory_space<vmem>>, vector<1x128x128xf32>
    %41 = vector.shape_cast %40 : vector<1x128x128xf32> to vector<128x128xf32>
    %cst_41 = arith.constant dense<0.000000e+00> : vector<32x128xf32>
    %42 = tpu.matmul %37, %41, %cst_41 {dimension_numbers = #tpu.dot_dimension_numbers<[1], [0], [0], [1], [0, 0, 1, 1], [], []>} : vector<32x128xf32>, vector<128x128xf32>, vector<32x128xf32> -> vector<32x128xf32>
    %c1_42 = arith.constant 1 : index
    %c0_43 = arith.constant 0 : index
    %c0_44 = arith.constant 0 : index
    %43 = vector.load %arg7[%c1_42, %c0_43, %c0_44] : memref<3x128x128xf32, #tpu.memory_space<vmem>>, vector<1x128x128xf32>
    %44 = vector.shape_cast %43 : vector<1x128x128xf32> to vector<128x128xf32>
    %cst_45 = arith.constant dense<0.000000e+00> : vector<32x128xf32>
    %45 = tpu.matmul %35, %44, %cst_45 {dimension_numbers = #tpu.dot_dimension_numbers<[1], [0], [0], [1], [0, 0, 1, 1], [], []>} : vector<32x128xf32>, vector<128x128xf32>, vector<32x128xf32> -> vector<32x128xf32>
    %46 = arith.addf %42, %45 : vector<32x128xf32>
    %c2_46 = arith.constant 2 : index
    %c0_47 = arith.constant 0 : index
    %c0_48 = arith.constant 0 : index
    %47 = vector.load %arg7[%c2_46, %c0_47, %c0_48] : memref<3x128x128xf32, #tpu.memory_space<vmem>>, vector<1x128x128xf32>
    %48 = vector.shape_cast %47 : vector<1x128x128xf32> to vector<128x128xf32>
    %cst_49 = arith.constant dense<0.000000e+00> : vector<32x128xf32>
    %49 = tpu.matmul %39, %48, %cst_49 {dimension_numbers = #tpu.dot_dimension_numbers<[1], [0], [0], [1], [0, 0, 1, 1], [], []>} : vector<32x128xf32>, vector<128x128xf32>, vector<32x128xf32> -> vector<32x128xf32>
    %50 = arith.addf %46, %49 : vector<32x128xf32>
    %c0_50 = arith.constant 0 : index
    %c0_51 = arith.constant 0 : index
    %51 = vector.load %arg12[%c0_50, %c0_51] : memref<2x32xf32, #tpu.memory_space<vmem>>, vector<2x32xf32>
    %cst_52 = arith.constant dense<0.000000e+00> : vector<2x128xf32>
    %52 = tpu.matmul %51, %50, %cst_52 {dimension_numbers = #tpu.dot_dimension_numbers<[1], [0], [0], [1], [0, 0, 1, 1], [], []>} : vector<2x32xf32>, vector<32x128xf32>, vector<2x128xf32> -> vector<2x128xf32>
    %c0_53 = arith.constant 0 : index
    %c0_54 = arith.constant 0 : index
    %53 = vector.load %arg14[%c0_53, %c0_54] : memref<128x4xf32, #tpu.memory_space<vmem>>, vector<128x4xf32>
    %cst_55 = arith.constant dense<0.000000e+00> : vector<2x4xf32>
    %54 = tpu.matmul %52, %53, %cst_55 {dimension_numbers = #tpu.dot_dimension_numbers<[1], [0], [0], [1], [0, 0, 1, 1], [], []>} : vector<2x128xf32>, vector<128x4xf32>, vector<2x4xf32> -> vector<2x4xf32>
    %c0_56 = arith.constant 0 : index
    %c0_57 = arith.constant 0 : index
    %55 = vector.load %arg15[%c0_56, %c0_57] : memref<1x4xf32, #tpu.memory_space<vmem>>, vector<1x4xf32>
    %56 = vector.broadcast %55 : vector<1x4xf32> to vector<2x4xf32>
    %57 = arith.addf %54, %56 : vector<2x4xf32>
    %cst_58 = arith.constant 0.000000e+00 : f32
    %58 = vector.broadcast %cst_58 : f32 to vector<2x4xf32>
    %59 = arith.maximumf %57, %58 : vector<2x4xf32>
    %c0_59 = arith.constant 0 : index
    %c0_60 = arith.constant 0 : index
    %60 = vector.load %arg16[%c0_59, %c0_60] : memref<4x128xf32, #tpu.memory_space<vmem>>, vector<4x128xf32>
    %cst_61 = arith.constant dense<0.000000e+00> : vector<2x128xf32>
    %61 = tpu.matmul %59, %60, %cst_61 {dimension_numbers = #tpu.dot_dimension_numbers<[1], [0], [0], [1], [0, 0, 1, 1], [], []>} : vector<2x4xf32>, vector<4x128xf32>, vector<2x128xf32> -> vector<2x128xf32>
    %c0_62 = arith.constant 0 : index
    %c0_63 = arith.constant 0 : index
    %62 = vector.load %arg17[%c0_62, %c0_63] : memref<1x128xf32, #tpu.memory_space<vmem>>, vector<1x128xf32>
    %63 = vector.broadcast %62 : vector<1x128xf32> to vector<2x128xf32>
    %64 = arith.addf %61, %63 : vector<2x128xf32>
    %cst_64 = arith.constant 0.000000e+00 : f32
    %65 = vector.broadcast %cst_64 : f32 to vector<2x128xf32>
    %66 = arith.subf %65, %64 : vector<2x128xf32>
    %67 = math.exp %66 : vector<2x128xf32>
    %cst_65 = arith.constant 1.000000e+00 : f32
    %68 = vector.broadcast %cst_65 : f32 to vector<2x128xf32>
    %69 = arith.addf %68, %67 : vector<2x128xf32>
    %70 = tpu.reciprocal %69 : vector<2x128xf32> -> vector<2x128xf32>
    %c0_66 = arith.constant 0 : index
    %c0_67 = arith.constant 0 : index
    %71 = vector.load %arg13[%c0_66, %c0_67] : memref<32x2xf32, #tpu.memory_space<vmem>>, vector<32x2xf32>
    %cst_68 = arith.constant dense<0.000000e+00> : vector<32x128xf32>
    %72 = tpu.matmul %71, %70, %cst_68 {dimension_numbers = #tpu.dot_dimension_numbers<[1], [0], [0], [1], [0, 0, 1, 1], [], []>} : vector<32x2xf32>, vector<2x128xf32>, vector<32x128xf32> -> vector<32x128xf32>
    %73 = arith.mulf %50, %72 : vector<32x128xf32>
    %74 = arith.addf %73, %4 : vector<32x128xf32>
    %c0_69 = arith.constant 0 : index
    %c0_70 = arith.constant 0 : index
    %75 = vector.load %arg18[%c0_69, %c0_70] : memref<32x128xf32, #tpu.memory_space<vmem>>, vector<32x128xf32>
    tpu.vector_store %arg18[%c0_69, %c0_70], %74 {strides = array<i32>} : memref<32x128xf32, #tpu.memory_space<vmem>>, vector<32x128xf32>,
    return
  }
  func.func @transform_0(%arg0: i32) -> (i32, i32) {
    %c0_i32 = arith.constant 0 : i32
    %c0_i32_0 = arith.constant 0 : i32
    return %arg0, %c0_i32 : i32, i32
  }
  func.func @transform_1(%arg0: i32) -> (i32, i32) {
    %c0_i32 = arith.constant 0 : i32
    %c0_i32_0 = arith.constant 0 : i32
    %c0_i32_1 = arith.constant 0 : i32
    return %c0_i32, %c0_i32_0 : i32, i32
  }
  func.func @transform_2(%arg0: i32) -> (i32, i32) {
    %c0_i32 = arith.constant 0 : i32
    %c0_i32_0 = arith.constant 0 : i32
    %c0_i32_1 = arith.constant 0 : i32
    return %c0_i32, %c0_i32_0 : i32, i32
  }
  func.func @transform_3(%arg0: i32) -> (i32, i32) {
    %c0_i32 = arith.constant 0 : i32
    %c0_i32_0 = arith.constant 0 : i32
    %c0_i32_1 = arith.constant 0 : i32
    return %c0_i32, %c0_i32_0 : i32, i32
  }
  func.func @transform_4(%arg0: i32) -> (i32, i32) {
    %c0_i32 = arith.constant 0 : i32
    %c0_i32_0 = arith.constant 0 : i32
    %c0_i32_1 = arith.constant 0 : i32
    return %c0_i32, %c0_i32_0 : i32, i32
  }
  func.func @transform_5(%arg0: i32) -> (i32, i32, i32) {
    %c0_i32 = arith.constant 0 : i32
    %c0_i32_0 = arith.constant 0 : i32
    %c0_i32_1 = arith.constant 0 : i32
    %c0_i32_2 = arith.constant 0 : i32
    return %c0_i32, %c0_i32_0, %c0_i32_1 : i32, i32, i32
  }
  func.func @transform_6(%arg0: i32) -> (i32, i32, i32) {
    %c0_i32 = arith.constant 0 : i32
    %c0_i32_0 = arith.constant 0 : i32
    %c0_i32_1 = arith.constant 0 : i32
    %c0_i32_2 = arith.constant 0 : i32
    return %c0_i32, %c0_i32_0, %c0_i32_1 : i32, i32, i32
  }
  func.func @transform_7(%arg0: i32) -> (i32, i32) {
    %c0_i32 = arith.constant 0 : i32
    %c0_i32_0 = arith.constant 0 : i32
    %c0_i32_1 = arith.constant 0 : i32
    return %c0_i32, %c0_i32_0 : i32, i32
  }
  func.func @transform_8(%arg0: i32) -> (i32, i32) {
    %c0_i32 = arith.constant 0 : i32
    %c0_i32_0 = arith.constant 0 : i32
    %c0_i32_1 = arith.constant 0 : i32
    return %c0_i32, %c0_i32_0 : i32, i32
  }
  func.func @transform_9(%arg0: i32) -> (i32, i32) {
    %c0_i32 = arith.constant 0 : i32
    %c0_i32_0 = arith.constant 0 : i32
    %c0_i32_1 = arith.constant 0 : i32
    return %c0_i32, %c0_i32_0 : i32, i32
  }
  func.func @transform_10(%arg0: i32) -> (i32, i32) {
    %c0_i32 = arith.constant 0 : i32
    %c0_i32_0 = arith.constant 0 : i32
    %c0_i32_1 = arith.constant 0 : i32
    return %c0_i32, %c0_i32_0 : i32, i32
  }
  func.func @transform_11(%arg0: i32) -> (i32, i32) {
    %c0_i32 = arith.constant 0 : i32
    %c0_i32_0 = arith.constant 0 : i32
    %c0_i32_1 = arith.constant 0 : i32
    return %c0_i32, %c0_i32_0 : i32, i32
  }
  func.func @transform_12(%arg0: i32) -> (i32, i32) {
    %c0_i32 = arith.constant 0 : i32
    %c0_i32_0 = arith.constant 0 : i32
    %c0_i32_1 = arith.constant 0 : i32
    return %c0_i32, %c0_i32_0 : i32, i32
  }
  func.func @transform_13(%arg0: i32) -> (i32, i32) {
    %c0_i32 = arith.constant 0 : i32
    %c0_i32_0 = arith.constant 0 : i32
    %c0_i32_1 = arith.constant 0 : i32
    return %c0_i32, %c0_i32_0 : i32, i32
  }
  func.func @transform_14(%arg0: i32) -> (i32, i32) {
    %c0_i32 = arith.constant 0 : i32
    %c0_i32_0 = arith.constant 0 : i32
    %c0_i32_1 = arith.constant 0 : i32
    return %c0_i32, %c0_i32_0 : i32, i32
  }
  func.func @transform_15(%arg0: i32) -> (i32, i32) {
    %c0_i32 = arith.constant 0 : i32
    %c0_i32_0 = arith.constant 0 : i32
    %c0_i32_1 = arith.constant 0 : i32
    return %c0_i32, %c0_i32_0 : i32, i32
  }
  func.func @transform_16(%arg0: i32) -> (i32, i32) {
    %c0_i32 = arith.constant 0 : i32
    %c0_i32_0 = arith.constant 0 : i32
    %c0_i32_1 = arith.constant 0 : i32
    return %c0_i32, %c0_i32_0 : i32, i32
  }
  func.func @transform_17(%arg0: i32) -> (i32, i32) {
    %c0_i32 = arith.constant 0 : i32
    %c0_i32_0 = arith.constant 0 : i32
    return %arg0, %c0_i32 : i32, i32
  }
}

</mosaic_0001>

<llo_original>
// kernel: tpu_custom_call.1
$region0: #{tpu_custom_call.1}
  #allocation0 [shape = 'u32[]', space=smem, size = 0x4, offset = 0x4, fixed_abs, tag = 'smem constant byte address 0x4 - core index']
  #allocation1 [shape = 'u32[144,128]{1,0:T(1,128)}', space=vmem, size = 0x12000, scoped, tag = 'internal scratch']
  %s0 = inlined_call_operand.vmem [shape: f32[16,64], index: 0, kind: input, shape index: {}]
  %s1 = inlined_call_operand.vmem [shape: f32[32,16], index: 1, kind: input, shape index: {}]
  %s2 = inlined_call_operand.vmem [shape: f32[64,128], index: 2, kind: input, shape index: {}]
  %s3 = inlined_call_operand.vmem [shape: f32[32,32], index: 3, kind: input, shape index: {}]
  %s4 = inlined_call_operand.vmem [shape: f32[32,32], index: 4, kind: input, shape index: {}]
  %s5 = inlined_call_operand.hbm [shape: f32[3,128,128], index: 5, kind: input, shape index: {}]
  %s6 = inlined_call_operand.hbm [shape: f32[3,128,128], index: 6, kind: input, shape index: {}]
  %s7 = inlined_call_operand.vmem [shape: f32[1,128], index: 7, kind: input, shape index: {}]
  %s8 = inlined_call_operand.vmem [shape: f32[1,128], index: 8, kind: input, shape index: {}]
  %s9 = inlined_call_operand.vmem [shape: f32[1,128], index: 9, kind: input, shape index: {}]
  %s10 = inlined_call_operand.vmem [shape: f32[1,128], index: 10, kind: input, shape index: {}]
  %s11 = inlined_call_operand.vmem [shape: f32[2,32], index: 11, kind: input, shape index: {}]
  %s12 = inlined_call_operand.vmem [shape: f32[32,2], index: 12, kind: input, shape index: {}]
  %s13 = inlined_call_operand.vmem [shape: f32[128,4], index: 13, kind: input, shape index: {}]
  %s14 = inlined_call_operand.vmem [shape: f32[1,4], index: 14, kind: input, shape index: {}]
  %s15 = inlined_call_operand.vmem [shape: f32[4,128], index: 15, kind: input, shape index: {}]
  %s16 = inlined_call_operand.vmem [shape: f32[1,128], index: 16, kind: input, shape index: {}]
  %s17 = inlined_call_operand.hbm [shape: f32[32,128], index: 17, kind: output, shape index: {}]
  %s18 = sld [smem:[#allocation0]]
  $region86: #{tpu_custom_call.1} parent=0
    _
  %s20 = ssub.s32 1, %s18
  %s21 = scalar_select 0, %s20, %s18
  $region1: #{tpu_custom_call.1} parent=0
    #allocation2 [shape = 'u8[196608]{0}', space=vmem, size = 0x30000, scoped, tag = 'input window, operand 5, single buffered']
    #allocation3 [shape = 's32[1]{0}', space=sflag, size = 0x4, scoped, tag = 'scoped memory for tpu_custom_call.1']
    #allocation4 [shape = 's32[1]{0}', space=sflag, size = 0x4, scoped, tag = 'scoped memory for tpu_custom_call.1']
    #allocation5 [shape = 'u8[196608]{0}', space=vmem, size = 0x30000, scoped, tag = 'input window, operand 6, single buffered']
    #allocation6 [shape = 's32[1]{0}', space=sflag, size = 0x4, scoped, tag = 'scoped memory for tpu_custom_call.1']
    #allocation7 [shape = 'u8[16384]{0}', space=vmem, size = 0x4000, scoped, tag = 'output window, operand 0, single buffered']
    %22 = vsyncpa [#allocation3], 0
    %23 = vsyncpa [#allocation6], 0
    %24 = vsyncpa [#allocation4], 0
    // Predicated region
    $region2: #{tpu_custom_call.1} parent=1 // pred_check
      _
    $region3: #{tpu_custom_call.1} parent=1 // pred_check_branch
      %26 = sbr.rel (0) target = $region5
    $region4: #{tpu_custom_call.1} parent=1 // pred_region
      _
    $region5: #{tpu_custom_call.1} parent=1 // pred_fallthru
      _
    // Predicated region
    $region6: #{tpu_custom_call.1} parent=1 // pred_check
      _
    $region7: #{tpu_custom_call.1} parent=1 // pred_check_branch
      %28 = sbr.rel (0) target = $region9
    $region8: #{tpu_custom_call.1} parent=1 // pred_region
      _
    $region9: #{tpu_custom_call.1} parent=1 // pred_fallthru
      _
    // Predicated region
    $region10: #{tpu_custom_call.1} parent=1 // pred_check
      _
    $region11: #{tpu_custom_call.1} parent=1 // pred_check_branch
      %30 = sbr.rel (0) target = $region13
    $region12: #{tpu_custom_call.1} parent=1 // pred_region
      _
    $region13: #{tpu_custom_call.1} parent=1 // pred_fallthru
      _
    // Predicated region
    $region14: #{tpu_custom_call.1} parent=1 // pred_check
      _
    $region15: #{tpu_custom_call.1} parent=1 // pred_check_branch
      %32 = sbr.rel (0) target = $region17
    $region16: #{tpu_custom_call.1} parent=1 // pred_region
      _
    $region17: #{tpu_custom_call.1} parent=1 // pred_fallthru
      _
    // Predicated region
    $region18: #{tpu_custom_call.1} parent=1 // pred_check
      _
    $region19: #{tpu_custom_call.1} parent=1 // pred_check_branch
      %34 = sbr.rel (0) target = $region21
    $region20: #{tpu_custom_call.1} parent=1 // pred_region
      _
    $region21: #{tpu_custom_call.1} parent=1 // pred_fallthru
      _
    // Predicated region
    $region22: #{tpu_custom_call.1} parent=1 // pred_check
      _
    $region23: #{tpu_custom_call.1} parent=1 // pred_check_branch
      %36 = sbr.rel (0) target = $region25
    $region24: #{tpu_custom_call.1} parent=1 // pred_region
      %s38 = ssub.s32 6144, 6144
      %39 = vsyncadd [#allocation3], %s38
      %s40 = sshll.u32 [#allocation2], 4
      %s41 = int_to_ptr.vmem [resolvable:$true] %s40
      %46 = dma.hbm_to_vmem [thread:$0]  %s5, 6144, %s41, [#allocation3], 128, 128, 8
    $region25: #{tpu_custom_call.1} parent=1 // pred_fallthru
      _
    // Predicated region
    $region26: #{tpu_custom_call.1} parent=1 // pred_check
      _
    $region27: #{tpu_custom_call.1} parent=1 // pred_check_branch
      %48 = sbr.rel (0) target = $region29
    $region28: #{tpu_custom_call.1} parent=1 // pred_region
      %s50 = ssub.s32 6144, 6144
      %51 = vsyncadd [#allocation6], %s50
      %s52 = sshll.u32 [#allocation5], 4
      %s53 = int_to_ptr.vmem [resolvable:$true] %s52
      %58 = dma.hbm_to_vmem [thread:$0]  %s6, 6144, %s53, [#allocation6], 128, 128, 8
    $region29: #{tpu_custom_call.1} parent=1 // pred_fallthru
      _
    // Predicated region
    $region30: #{tpu_custom_call.1} parent=1 // pred_check
      _
    $region31: #{tpu_custom_call.1} parent=1 // pred_check_branch
      %60 = sbr.rel (0) target = $region33
    $region32: #{tpu_custom_call.1} parent=1 // pred_region
      _
    $region33: #{tpu_custom_call.1} parent=1 // pred_fallthru
      _
    // Predicated region
    $region34: #{tpu_custom_call.1} parent=1 // pred_check
      _
    $region35: #{tpu_custom_call.1} parent=1 // pred_check_branch
      %62 = sbr.rel (0) target = $region37
    $region36: #{tpu_custom_call.1} parent=1 // pred_region
      _
    $region37: #{tpu_custom_call.1} parent=1 // pred_fallthru
      _
    // Predicated region
    $region38: #{tpu_custom_call.1} parent=1 // pred_check
      _
    $region39: #{tpu_custom_call.1} parent=1 // pred_check_branch
      %64 = sbr.rel (0) target = $region41
    $region40: #{tpu_custom_call.1} parent=1 // pred_region
      _
    $region41: #{tpu_custom_call.1} parent=1 // pred_fallthru
      _
    // Predicated region
    $region42: #{tpu_custom_call.1} parent=1 // pred_check
      _
    $region43: #{tpu_custom_call.1} parent=1 // pred_check_branch
      %66 = sbr.rel (0) target = $region45
    $region44: #{tpu_custom_call.1} parent=1 // pred_region
      _
    $region45: #{tpu_custom_call.1} parent=1 // pred_fallthru
      _
    // Predicated region
    $region46: #{tpu_custom_call.1} parent=1 // pred_check
      _
    $region47: #{tpu_custom_call.1} parent=1 // pred_check_branch
      %68 = sbr.rel (0) target = $region49
    $region48: #{tpu_custom_call.1} parent=1 // pred_region
      _
    $region49: #{tpu_custom_call.1} parent=1 // pred_fallthru
      _
    // Predicated region
    $region50: #{tpu_custom_call.1} parent=1 // pred_check
      _
    $region51: #{tpu_custom_call.1} parent=1 // pred_check_branch
      %70 = sbr.rel (0) target = $region53
    $region52: #{tpu_custom_call.1} parent=1 // pred_region
      _
    $region53: #{tpu_custom_call.1} parent=1 // pred_fallthru
      _
    // Predicated region
    $region54: #{tpu_custom_call.1} parent=1 // pred_check
      _
    $region55: #{tpu_custom_call.1} parent=1 // pred_check_branch
      %72 = sbr.rel (0) target = $region57
    $region56: #{tpu_custom_call.1} parent=1 // pred_region
      _
    $region57: #{tpu_custom_call.1} parent=1 // pred_fallthru
      _
    // Predicated region
    $region58: #{tpu_custom_call.1} parent=1 // pred_check
      _
    $region59: #{tpu_custom_call.1} parent=1 // pred_check_branch
      %74 = sbr.rel (0) target = $region61
    $region60: #{tpu_custom_call.1} parent=1 // pred_region
      _
    $region61: #{tpu_custom_call.1} parent=1 // pred_fallthru
      _
    // Predicated region
    $region62: #{tpu_custom_call.1} parent=1 // pred_check
      _
    $region63: #{tpu_custom_call.1} parent=1 // pred_check_branch
      %76 = sbr.rel (0) target = $region65
    $region64: #{tpu_custom_call.1} parent=1 // pred_region
      _
    $region65: #{tpu_custom_call.1} parent=1 // pred_fallthru
      _
    // Predicated region
    $region66: #{tpu_custom_call.1} parent=1 // pred_check
      _
    $region67: #{tpu_custom_call.1} parent=1 // pred_check_branch
      %78 = sbr.rel (0) target = $region69
    $region68: #{tpu_custom_call.1} parent=1 // pred_region
      _
    $region69: #{tpu_custom_call.1} parent=1 // pred_fallthru
      _
    // Predicated region
    $region70: #{tpu_custom_call.1} parent=1 // pred_check
      _
    $region71: #{tpu_custom_call.1} parent=1 // pred_check_branch
      %80 = sbr.rel (0) target = $region73
    $region72: #{tpu_custom_call.1} parent=1 // pred_region
      %81 = dma.done [#allocation3], 6144
    $region73: #{tpu_custom_call.1} parent=1 // pred_fallthru
      _
    // Predicated region
    $region74: #{tpu_custom_call.1} parent=1 // pred_check
      _
    $region75: #{tpu_custom_call.1} parent=1 // pred_check_branch
      %83 = sbr.rel (0) target = $region77
    $region76: #{tpu_custom_call.1} parent=1 // pred_region
      %84 = dma.done [#allocation6], 6144
    $region77: #{tpu_custom_call.1} parent=1 // pred_fallthru
      _
    %v85 = vld [vmem:[%s1] sm:$0xff]
    %v86 = vld [vmem:[%s1 + $0x8] sm:$0xff]
    %v87 = vld [vmem:[%s1 + $0x10] sm:$0xff]
    %v88 = vld [vmem:[%s1 + $0x18] sm:$0xff]
    %v89 = vld [vmem:[%s0] sm:$0xff]
    %v90 = vld [vmem:[%s0 + $0x8] sm:$0xff]
    %vm91 = vcmask 130048
    %v93 = vsel %vm91, %v85, 0
    %v96 = vsel %vm91, %v86, 0
    %v99 = vsel %vm91, %v87, 0
    %v102 = vsel %vm91, %v88, 0
    %104 = vmatprep.subr.mxu0 0.0
    %105 = vmatpush1.msra.mxu0 0.0
    %106 = vmatprep.subr.mxu0 0.0
    %107 = vmatpush1.msra.mxu0 0.0
    %108 = vmatprep.subr.mxu0 0.0
    %109 = vmatpush1.msra.mxu0 0.0
    %110 = vmatprep.subr.mxu0 0.0
    %111 = vmatpush1.msra.mxu0 0.0
    %112 = vmatprep.subr.mxu0 0.0
    %113 = vmatpush1.msra.mxu0 0.0
    %114 = vmatprep.subr.mxu0 0.0
    %115 = vmatpush1.msra.mxu0 0.0
    %116 = vmatprep.subr.mxu0 0.0
    %117 = vmatpush1.msra.mxu0 0.0
    %118 = vmatprep.subr.mxu0 0.0
    %119 = vmatpush1.msra.mxu0 0.0
    %120 = vmatprep.subr.mxu0 0.0
    %121 = vmatpush1.msra.mxu0 0.0
    %122 = vmatprep.subr.mxu0 0.0
    %123 = vmatpush1.msra.mxu0 0.0
    %124 = vmatprep.subr.mxu0 0.0
    %125 = vmatpush1.msra.mxu0 0.0
    %126 = vmatprep.subr.mxu0 0.0
    %127 = vmatpush1.msra.mxu0 0.0
    %128 = vmatprep.subr.mxu0 0.0
    %129 = vmatpush1.msra.mxu0 0.0
    %130 = vmatprep.subr.mxu0 0.0
    %131 = vmatpush1.msra.mxu0 0.0
    %132 = vmatprep.subr.mxu0 0.0
    %133 = vmatpush1.msra.mxu0 %v90
    %134 = vmatprep.subr.mxu0 0.0
    %135 = vmatpush1.msra.mxu0 %v89
    %136 = vmatprep.subr.mxu0 0.0
    %137 = vmatpush2.msra.mxu0 0.0
    %138 = vmatprep.subr.mxu0 0.0
    %139 = vmatpush2.msra.mxu0 0.0
    %140 = vmatprep.subr.mxu0 0.0
    %141 = vmatpush2.msra.mxu0 0.0
    %142 = vmatprep.subr.mxu0 0.0
    %143 = vmatpush2.msra.mxu0 0.0
    %144 = vmatprep.subr.mxu0 0.0
    %145 = vmatpush2.msra.mxu0 0.0
    %146 = vmatprep.subr.mxu0 0.0
    %147 = vmatpush2.msra.mxu0 0.0
    %148 = vmatprep.subr.mxu0 0.0
    %149 = vmatpush2.msra.mxu0 0.0
    %150 = vmatprep.subr.mxu0 0.0
    %151 = vmatpush2.msra.mxu0 0.0
    %152 = vmatprep.subr.mxu0 0.0
    %153 = vmatpush2.msra.mxu0 0.0
    %154 = vmatprep.subr.mxu0 0.0
    %155 = vmatpush2.msra.mxu0 0.0
    %156 = vmatprep.subr.mxu0 0.0
    %157 = vmatpush2.msra.mxu0 0.0
    %158 = vmatprep.subr.mxu0 0.0
    %159 = vmatpush2.msra.mxu0 0.0
    %160 = vmatprep.subr.mxu0 0.0
    %161 = vmatpush2.msra.mxu0 0.0
    %162 = vmatprep.subr.mxu0 0.0
    %163 = vmatpush2.msra.mxu0 0.0
    %164 = vmatprep.subr.mxu0 0.0
    %165 = vmatpush2.msra.mxu0 0.0
    %166 = vmatprep.subr.mxu0 0.0
    %167 = vmatpush2.msra.mxu0 0.0
    %168 = vmatprep.mubr.f32.mxu0 0.0
    %169 = vmatmul.mubr.f32.gmra.mxu0 %v93
    %v170 = vpop.f32.mrf.mxu0
    %v171 = vadd.f32 0.0, %v170
    %v172 = vpop.f32.mrf.mxu0
    %173 = vmatprep.mubr.f32.mxu0 0.0
    %174 = vmatmul.mubr.f32.gmra.mxu0 %v96
    %v175 = vpop.f32.mrf.mxu0
    %v176 = vadd.f32 0.0, %v175
    %v177 = vpop.f32.mrf.mxu0
    %178 = vmatprep.mubr.f32.mxu0 0.0
    %179 = vmatmul.mubr.f32.gmra.mxu0 %v99
    %v180 = vpop.f32.mrf.mxu0
    %v181 = vadd.f32 0.0, %v180
    %v182 = vpop.f32.mrf.mxu0
    %183 = vmatprep.mubr.f32.mxu0 0.0
    %184 = vmatmul.mubr.f32.gmra.mxu0 %v102
    %v185 = vpop.f32.mrf.mxu0
    %v186 = vadd.f32 0.0, %v185
    %v187 = vpop.f32.mrf.mxu0
    %188 = vdwg.mxu0
    %v189 = vld [vmem:[%s2] sm:$0xff]
    %v190 = vld [vmem:[%s2 + $0x8] sm:$0xff]
    %v191 = vld [vmem:[%s2 + $0x10] sm:$0xff]
    %v192 = vld [vmem:[%s2 + $0x18] sm:$0xff]
    %v193 = vld [vmem:[%s2 + $0x20] sm:$0xff]
    %v194 = vld [vmem:[%s2 + $0x28] sm:$0xff]
    %v195 = vld [vmem:[%s2 + $0x30] sm:$0xff]
    %v196 = vld [vmem:[%s2 + $0x38] sm:$0xff]
    %vm197 = vcmask 523264
    %v199 = vsel %vm197, %v171, 0
    %v202 = vsel %vm197, %v176, 0
    %v205 = vsel %vm197, %v181, 0
    %v208 = vsel %vm197, %v186, 0
    %210 = vmatprep.subr.mxu0 0.0
    %211 = vmatpush1.msra.mxu0 0.0
    %212 = vmatprep.subr.mxu0 0.0
    %213 = vmatpush1.msra.mxu0 0.0
    %214 = vmatprep.subr.mxu0 0.0
    %215 = vmatpush1.msra.mxu0 0.0
    %216 = vmatprep.subr.mxu0 0.0
    %217 = vmatpush1.msra.mxu0 0.0
    %218 = vmatprep.subr.mxu0 0.0
    %219 = vmatpush1.msra.mxu0 0.0
    %220 = vmatprep.subr.mxu0 0.0
    %221 = vmatpush1.msra.mxu0 0.0
    %222 = vmatprep.subr.mxu0 0.0
    %223 = vmatpush1.msra.mxu0 0.0
    %224 = vmatprep.subr.mxu0 0.0
    %225 = vmatpush1.msra.mxu0 0.0
    %226 = vmatprep.subr.mxu0 0.0
    %227 = vmatpush1.msra.mxu0 %v196
    %228 = vmatprep.subr.mxu0 0.0
    %229 = vmatpush1.msra.mxu0 %v195
    %230 = vmatprep.subr.mxu0 0.0
    %231 = vmatpush1.msra.mxu0 %v194
    %232 = vmatprep.subr.mxu0 0.0
    %233 = vmatpush1.msra.mxu0 %v193
    %234 = vmatprep.subr.mxu0 0.0
    %235 = vmatpush1.msra.mxu0 %v192
    %236 = vmatprep.subr.mxu0 0.0
    %237 = vmatpush1.msra.mxu0 %v191
    %238 = vmatprep.subr.mxu0 0.0
    %239 = vmatpush1.msra.mxu0 %v190
    %240 = vmatprep.subr.mxu0 0.0
    %241 = vmatpush1.msra.mxu0 %v189
    %242 = vmatprep.subr.mxu0 0.0
    %243 = vmatpush2.msra.mxu0 0.0
    %244 = vmatprep.subr.mxu0 0.0
    %245 = vmatpush2.msra.mxu0 0.0
    %246 = vmatprep.subr.mxu0 0.0
    %247 = vmatpush2.msra.mxu0 0.0
    %248 = vmatprep.subr.mxu0 0.0
    %249 = vmatpush2.msra.mxu0 0.0
    %250 = vmatprep.subr.mxu0 0.0
    %251 = vmatpush2.msra.mxu0 0.0
    %252 = vmatprep.subr.mxu0 0.0
    %253 = vmatpush2.msra.mxu0 0.0
    %254 = vmatprep.subr.mxu0 0.0
    %255 = vmatpush2.msra.mxu0 0.0
    %256 = vmatprep.subr.mxu0 0.0
    %257 = vmatpush2.msra.mxu0 0.0
    %258 = vmatprep.subr.mxu0 0.0
    %259 = vmatpush2.msra.mxu0 0.0
    %260 = vmatprep.subr.mxu0 0.0
    %261 = vmatpush2.msra.mxu0 0.0
    %262 = vmatprep.subr.mxu0 0.0
    %263 = vmatpush2.msra.mxu0 0.0
    %264 = vmatprep.subr.mxu0 0.0
    %265 = vmatpush2.msra.mxu0 0.0
    %266 = vmatprep.subr.mxu0 0.0
    %267 = vmatpush2.msra.mxu0 0.0
    %268 = vmatprep.subr.mxu0 0.0
    %269 = vmatpush2.msra.mxu0 0.0
    %270 = vmatprep.subr.mxu0 0.0
    %271 = vmatpush2.msra.mxu0 0.0
    %272 = vmatprep.subr.mxu0 0.0
    %273 = vmatpush2.msra.mxu0 0.0
    %274 = vmatprep.mubr.f32.mxu0 0.0
    %275 = vmatmul.mubr.f32.gmra.mxu0 %v199
    %v276 = vpop.f32.mrf.mxu0
    %v277 = vadd.f32 0.0, %v276
    %v278 = vpop.f32.mrf.mxu0
    %279 = vmatprep.mubr.f32.mxu0 0.0
    %280 = vmatmul.mubr.f32.gmra.mxu0 %v202
    %v281 = vpop.f32.mrf.mxu0
    %v282 = vadd.f32 0.0, %v281
    %v283 = vpop.f32.mrf.mxu0
    %284 = vmatprep.mubr.f32.mxu0 0.0
    %285 = vmatmul.mubr.f32.gmra.mxu0 %v205
    %v286 = vpop.f32.mrf.mxu0
    %v287 = vadd.f32 0.0, %v286
    %v288 = vpop.f32.mrf.mxu0
    %289 = vmatprep.mubr.f32.mxu0 0.0
    %290 = vmatmul.mubr.f32.gmra.mxu0 %v208
    %v291 = vpop.f32.mrf.mxu0
    %v292 = vadd.f32 0.0, %v291
    %v293 = vpop.f32.mrf.mxu0
    %294 = vdwg.mxu0
    %v295 = vld [vmem:[%s7] sm:$0x1]
    %v297 = vlaneseq
    %v298 = vshrl.u32 %v297, 7
    %v299 = vsub.s32 0, %v298
    %v300 = vrot.slane %v295, %v299
    %v302 = vmul.f32 %v277, %v300
    %v303 = vmul.f32 %v282, %v300
    %v304 = vmul.f32 %v287, %v300
    %v305 = vmul.f32 %v292, %v300
    %v306 = vld [vmem:[%s8] sm:$0x1]
    %v308 = vlaneseq
    %v309 = vshrl.u32 %v308, 7
    %v310 = vsub.s32 0, %v309
    %v311 = vrot.slane %v306, %v310
    %v313 = vadd.f32 %v302, %v311
    %v314 = vadd.f32 %v303, %v311
    %v315 = vadd.f32 %v304, %v311
    %v316 = vadd.f32 %v305, %v311
    %v317 = vmax.f32 %v313, 0.0
    %v318 = vmax.f32 %v314, 0.0
    %v319 = vmax.f32 %v315, 0.0
    %v320 = vmax.f32 %v316, 0.0
    %v321 = vld [vmem:[%s3] sm:$0xff]
    %v322 = vld [vmem:[%s3 + $0x8] sm:$0xff]
    %v323 = vld [vmem:[%s3 + $0x10] sm:$0xff]
    %v324 = vld [vmem:[%s3 + $0x18] sm:$0xff]
    %vm325 = vcmask 261120
    %v327 = vsel %vm325, %v321, 0
    %v330 = vsel %vm325, %v322, 0
    %v333 = vsel %vm325, %v323, 0
    %v336 = vsel %vm325, %v324, 0
    %338 = vmatprep.subr.mxu0 0.0
    %339 = vmatpush1.msra.mxu0 0.0
    %340 = vmatprep.subr.mxu0 0.0
    %341 = vmatpush1.msra.mxu0 0.0
    %342 = vmatprep.subr.mxu0 0.0
    %343 = vmatpush1.msra.mxu0 0.0
    %344 = vmatprep.subr.mxu0 0.0
    %345 = vmatpush1.msra.mxu0 0.0
    %346 = vmatprep.subr.mxu0 0.0
    %347 = vmatpush1.msra.mxu0 0.0
    %348 = vmatprep.subr.mxu0 0.0
    %349 = vmatpush1.msra.mxu0 0.0
    %350 = vmatprep.subr.mxu0 0.0
    %351 = vmatpush1.msra.mxu0 0.0
    %352 = vmatprep.subr.mxu0 0.0
    %353 = vmatpush1.msra.mxu0 0.0
    %354 = vmatprep.subr.mxu0 0.0
    %355 = vmatpush1.msra.mxu0 0.0
    %356 = vmatprep.subr.mxu0 0.0
    %357 = vmatpush1.msra.mxu0 0.0
    %358 = vmatprep.subr.mxu0 0.0
    %359 = vmatpush1.msra.mxu0 0.0
    %360 = vmatprep.subr.mxu0 0.0
    %361 = vmatpush1.msra.mxu0 0.0
    %362 = vmatprep.subr.mxu0 0.0
    %363 = vmatpush1.msra.mxu0 %v320
    %364 = vmatprep.subr.mxu0 0.0
    %365 = vmatpush1.msra.mxu0 %v319
    %366 = vmatprep.subr.mxu0 0.0
    %367 = vmatpush1.msra.mxu0 %v318
    %368 = vmatprep.subr.mxu0 0.0
    %369 = vmatpush1.msra.mxu0 %v317
    %370 = vmatprep.subr.mxu0 0.0
    %371 = vmatpush2.msra.mxu0 0.0
    %372 = vmatprep.subr.mxu0 0.0
    %373 = vmatpush2.msra.mxu0 0.0
    %374 = vmatprep.subr.mxu0 0.0
    %375 = vmatpush2.msra.mxu0 0.0
    %376 = vmatprep.subr.mxu0 0.0
    %377 = vmatpush2.msra.mxu0 0.0
    %378 = vmatprep.subr.mxu0 0.0
    %379 = vmatpush2.msra.mxu0 0.0
    %380 = vmatprep.subr.mxu0 0.0
    %381 = vmatpush2.msra.mxu0 0.0
    %382 = vmatprep.subr.mxu0 0.0
    %383 = vmatpush2.msra.mxu0 0.0
    %384 = vmatprep.subr.mxu0 0.0
    %385 = vmatpush2.msra.mxu0 0.0
    %386 = vmatprep.subr.mxu0 0.0
    %387 = vmatpush2.msra.mxu0 0.0
    %388 = vmatprep.subr.mxu0 0.0
    %389 = vmatpush2.msra.mxu0 0.0
    %390 = vmatprep.subr.mxu0 0.0
    %391 = vmatpush2.msra.mxu0 0.0
    %392 = vmatprep.subr.mxu0 0.0
    %393 = vmatpush2.msra.mxu0 0.0
    %394 = vmatprep.subr.mxu0 0.0
    %395 = vmatpush2.msra.mxu0 0.0
    %396 = vmatprep.subr.mxu0 0.0
    %397 = vmatpush2.msra.mxu0 0.0
    %398 = vmatprep.subr.mxu0 0.0
    %399 = vmatpush2.msra.mxu0 0.0
    %400 = vmatprep.subr.mxu0 0.0
    %401 = vmatpush2.msra.mxu0 0.0
    %402 = vmatprep.mubr.f32.mxu0 0.0
    %403 = vmatmul.mubr.f32.gmra.mxu0 %v327
    %v404 = vpop.f32.mrf.mxu0
    %v405 = vadd.f32 0.0, %v404
    %v406 = vpop.f32.mrf.mxu0
    %407 = vmatprep.mubr.f32.mxu0 0.0
    %408 = vmatmul.mubr.f32.gmra.mxu0 %v330
    %v409 = vpop.f32.mrf.mxu0
    %v410 = vadd.f32 0.0, %v409
    %v411 = vpop.f32.mrf.mxu0
    %412 = vmatprep.mubr.f32.mxu0 0.0
    %413 = vmatmul.mubr.f32.gmra.mxu0 %v333
    %v414 = vpop.f32.mrf.mxu0
    %v415 = vadd.f32 0.0, %v414
    %v416 = vpop.f32.mrf.mxu0
    %417 = vmatprep.mubr.f32.mxu0 0.0
    %418 = vmatmul.mubr.f32.gmra.mxu0 %v336
    %v419 = vpop.f32.mrf.mxu0
    %v420 = vadd.f32 0.0, %v419
    %v421 = vpop.f32.mrf.mxu0
    %422 = vdwg.mxu0
    %v423 = vld [vmem:[%s4] sm:$0xff]
    %v424 = vld [vmem:[%s4 + $0x8] sm:$0xff]
    %v425 = vld [vmem:[%s4 + $0x10] sm:$0xff]
    %v426 = vld [vmem:[%s4 + $0x18] sm:$0xff]
    %v428 = vsel %vm325, %v423, 0
    %v431 = vsel %vm325, %v424, 0
    %v434 = vsel %vm325, %v425, 0
    %v437 = vsel %vm325, %v426, 0
    %439 = vmatprep.subr.mxu0 0.0
    %440 = vmatpush1.msra.mxu0 0.0
    %441 = vmatprep.subr.mxu0 0.0
    %442 = vmatpush1.msra.mxu0 0.0
    %443 = vmatprep.subr.mxu0 0.0
    %444 = vmatpush1.msra.mxu0 0.0
    %445 = vmatprep.subr.mxu0 0.0
    %446 = vmatpush1.msra.mxu0 0.0
    %447 = vmatprep.subr.mxu0 0.0
    %448 = vmatpush1.msra.mxu0 0.0
    %449 = vmatprep.subr.mxu0 0.0
    %450 = vmatpush1.msra.mxu0 0.0
    %451 = vmatprep.subr.mxu0 0.0
    %452 = vmatpush1.msra.mxu0 0.0
    %453 = vmatprep.subr.mxu0 0.0
    %454 = vmatpush1.msra.mxu0 0.0
    %455 = vmatprep.subr.mxu0 0.0
    %456 = vmatpush1.msra.mxu0 0.0
    %457 = vmatprep.subr.mxu0 0.0
    %458 = vmatpush1.msra.mxu0 0.0
    %459 = vmatprep.subr.mxu0 0.0
    %460 = vmatpush1.msra.mxu0 0.0
    %461 = vmatprep.subr.mxu0 0.0
    %462 = vmatpush1.msra.mxu0 0.0
    %463 = vmatprep.subr.mxu0 0.0
    %464 = vmatpush1.msra.mxu0 %v320
    %465 = vmatprep.subr.mxu0 0.0
    %466 = vmatpush1.msra.mxu0 %v319
    %467 = vmatprep.subr.mxu0 0.0
    %468 = vmatpush1.msra.mxu0 %v318
    %469 = vmatprep.subr.mxu0 0.0
    %470 = vmatpush1.msra.mxu0 %v317
    %471 = vmatprep.subr.mxu0 0.0
    %472 = vmatpush2.msra.mxu0 0.0
    %473 = vmatprep.subr.mxu0 0.0
    %474 = vmatpush2.msra.mxu0 0.0
    %475 = vmatprep.subr.mxu0 0.0
    %476 = vmatpush2.msra.mxu0 0.0
    %477 = vmatprep.subr.mxu0 0.0
    %478 = vmatpush2.msra.mxu0 0.0
    %479 = vmatprep.subr.mxu0 0.0
    %480 = vmatpush2.msra.mxu0 0.0
    %481 = vmatprep.subr.mxu0 0.0
    %482 = vmatpush2.msra.mxu0 0.0
    %483 = vmatprep.subr.mxu0 0.0
    %484 = vmatpush2.msra.mxu0 0.0
    %485 = vmatprep.subr.mxu0 0.0
    %486 = vmatpush2.msra.mxu0 0.0
    %487 = vmatprep.subr.mxu0 0.0
    %488 = vmatpush2.msra.mxu0 0.0
    %489 = vmatprep.subr.mxu0 0.0
    %490 = vmatpush2.msra.mxu0 0.0
    %491 = vmatprep.subr.mxu0 0.0
    %492 = vmatpush2.msra.mxu0 0.0
    %493 = vmatprep.subr.mxu0 0.0
    %494 = vmatpush2.msra.mxu0 0.0
    %495 = vmatprep.subr.mxu0 0.0
    %496 = vmatpush2.msra.mxu0 0.0
    %497 = vmatprep.subr.mxu0 0.0
    %498 = vmatpush2.msra.mxu0 0.0
    %499 = vmatprep.subr.mxu0 0.0
    %500 = vmatpush2.msra.mxu0 0.0
    %501 = vmatprep.subr.mxu0 0.0
    %502 = vmatpush2.msra.mxu0 0.0
    %503 = vmatprep.mubr.f32.mxu0 0.0
    %504 = vmatmul.mubr.f32.gmra.mxu0 %v428
    %v505 = vpop.f32.mrf.mxu0
    %v506 = vadd.f32 0.0, %v505
    %v507 = vpop.f32.mrf.mxu0
    %508 = vmatprep.mubr.f32.mxu0 0.0
    %509 = vmatmul.mubr.f32.gmra.mxu0 %v431
    %v510 = vpop.f32.mrf.mxu0
    %v511 = vadd.f32 0.0, %v510
    %v512 = vpop.f32.mrf.mxu0
    %513 = vmatprep.mubr.f32.mxu0 0.0
    %514 = vmatmul.mubr.f32.gmra.mxu0 %v434
    %v515 = vpop.f32.mrf.mxu0
    %v516 = vadd.f32 0.0, %v515
    %v517 = vpop.f32.mrf.mxu0
    %518 = vmatprep.mubr.f32.mxu0 0.0
    %519 = vmatmul.mubr.f32.gmra.mxu0 %v437
    %v520 = vpop.f32.mrf.mxu0
    %v521 = vadd.f32 0.0, %v520
    %v522 = vpop.f32.mrf.mxu0
    %523 = vdwg.mxu0
    %v524 = vld [vmem:[#allocation2] sm:$0xff]
    %v525 = vld [vmem:[#allocation2 + $0x8] sm:$0xff]
    %v526 = vld [vmem:[#allocation2 + $0x10] sm:$0xff]
    %v527 = vld [vmem:[#allocation2 + $0x18] sm:$0xff]
    %v528 = vld [vmem:[#allocation2 + $0x20] sm:$0xff]
    %v529 = vld [vmem:[#allocation2 + $0x28] sm:$0xff]
    %v530 = vld [vmem:[#allocation2 + $0x30] sm:$0xff]
    %v531 = vld [vmem:[#allocation2 + $0x38] sm:$0xff]
    %v532 = vld [vmem:[#allocation2 + $0x40] sm:$0xff]
    %v533 = vld [vmem:[#allocation2 + $0x48] sm:$0xff]
    %v534 = vld [vmem:[#allocation2 + $0x50] sm:$0xff]
    %v535 = vld [vmem:[#allocation2 + $0x58] sm:$0xff]
    %v536 = vld [vmem:[#allocation2 + $0x60] sm:$0xff]
    %v537 = vld [vmem:[#allocation2 + $0x68] sm:$0xff]
    %v538 = vld [vmem:[#allocation2 + $0x70] sm:$0xff]
    %v539 = vld [vmem:[#allocation2 + $0x78] sm:$0xff]
    %s540 = scalar_lea.vmem [#allocation2], 128
    %v541 = vld [vmem:[%s540] sm:$0xff]
    %v542 = vld [vmem:[%s540 + $0x8] sm:$0xff]
    %v543 = vld [vmem:[%s540 + $0x10] sm:$0xff]
    %v544 = vld [vmem:[%s540 + $0x18] sm:$0xff]
    %v545 = vld [vmem:[%s540 + $0x20] sm:$0xff]
    %v546 = vld [vmem:[%s540 + $0x28] sm:$0xff]
    %v547 = vld [vmem:[%s540 + $0x30] sm:$0xff]
    %v548 = vld [vmem:[%s540 + $0x38] sm:$0xff]
    %v549 = vld [vmem:[%s540 + $0x40] sm:$0xff]
    %v550 = vld [vmem:[%s540 + $0x48] sm:$0xff]
    %v551 = vld [vmem:[%s540 + $0x50] sm:$0xff]
    %v552 = vld [vmem:[%s540 + $0x58] sm:$0xff]
    %v553 = vld [vmem:[%s540 + $0x60] sm:$0xff]
    %v554 = vld [vmem:[%s540 + $0x68] sm:$0xff]
    %v555 = vld [vmem:[%s540 + $0x70] sm:$0xff]
    %v556 = vld [vmem:[%s540 + $0x78] sm:$0xff]
    %557 = vmatprep.subr.mxu0 0.0
    %558 = vmatpush1.msra.mxu0 %v556
    %559 = vmatprep.subr.mxu0 0.0
    %560 = vmatpush1.msra.mxu0 %v555
    %561 = vmatprep.subr.mxu0 0.0
    %562 = vmatpush1.msra.mxu0 %v554
    %563 = vmatprep.subr.mxu0 0.0
    %564 = vmatpush1.msra.mxu0 %v553
    %565 = vmatprep.subr.mxu0 0.0
    %566 = vmatpush1.msra.mxu0 %v552
    %567 = vmatprep.subr.mxu0 0.0
    %568 = vmatpush1.msra.mxu0 %v551
    %569 = vmatprep.subr.mxu0 0.0
    %570 = vmatpush1.msra.mxu0 %v550
    %571 = vmatprep.subr.mxu0 0.0
    %572 = vmatpush1.msra.mxu0 %v549
    %573 = vmatprep.subr.mxu0 0.0
    %574 = vmatpush1.msra.mxu0 %v548
    %575 = vmatprep.subr.mxu0 0.0
    %576 = vmatpush1.msra.mxu0 %v547
    %577 = vmatprep.subr.mxu0 0.0
    %578 = vmatpush1.msra.mxu0 %v546
    %579 = vmatprep.subr.mxu0 0.0
    %580 = vmatpush1.msra.mxu0 %v545
    %581 = vmatprep.subr.mxu0 0.0
    %582 = vmatpush1.msra.mxu0 %v544
    %583 = vmatprep.subr.mxu0 0.0
    %584 = vmatpush1.msra.mxu0 %v543
    %585 = vmatprep.subr.mxu0 0.0
    %586 = vmatpush1.msra.mxu0 %v542
    %587 = vmatprep.subr.mxu0 0.0
    %588 = vmatpush1.msra.mxu0 %v541
    %589 = vmatprep.subr.mxu0 0.0
    %590 = vmatpush2.msra.mxu0 0.0
    %591 = vmatprep.subr.mxu0 0.0
    %592 = vmatpush2.msra.mxu0 0.0
    %593 = vmatprep.subr.mxu0 0.0
    %594 = vmatpush2.msra.mxu0 0.0
    %595 = vmatprep.subr.mxu0 0.0
    %596 = vmatpush2.msra.mxu0 0.0
    %597 = vmatprep.subr.mxu0 0.0
    %598 = vmatpush2.msra.mxu0 0.0
    %599 = vmatprep.subr.mxu0 0.0
    %600 = vmatpush2.msra.mxu0 0.0
    %601 = vmatprep.subr.mxu0 0.0
    %602 = vmatpush2.msra.mxu0 0.0
    %603 = vmatprep.subr.mxu0 0.0
    %604 = vmatpush2.msra.mxu0 0.0
    %605 = vmatprep.subr.mxu0 0.0
    %606 = vmatpush2.msra.mxu0 0.0
    %607 = vmatprep.subr.mxu0 0.0
    %608 = vmatpush2.msra.mxu0 0.0
    %609 = vmatprep.subr.mxu0 0.0
    %610 = vmatpush2.msra.mxu0 0.0
    %611 = vmatprep.subr.mxu0 0.0
    %612 = vmatpush2.msra.mxu0 0.0
    %613 = vmatprep.subr.mxu0 0.0
    %614 = vmatpush2.msra.mxu0 0.0
    %615 = vmatprep.subr.mxu0 0.0
    %616 = vmatpush2.msra.mxu0 0.0
    %617 = vmatprep.subr.mxu0 0.0
    %618 = vmatpush2.msra.mxu0 0.0
    %619 = vmatprep.subr.mxu0 0.0
    %620 = vmatpush2.msra.mxu0 0.0
    %621 = vmatprep.mubr.f32.mxu0 0.0
    %622 = vmatmul.mubr.f32.gmra.mxu0 %v317
    %v623 = vpop.f32.mrf.mxu0
    %v624 = vadd.f32 0.0, %v623
    %v625 = vpop.f32.mrf.mxu0
    %626 = vmatprep.mubr.f32.mxu0 0.0
    %627 = vmatmul.mubr.f32.gmra.mxu0 %v318
    %v628 = vpop.f32.mrf.mxu0
    %v629 = vadd.f32 0.0, %v628
    %v630 = vpop.f32.mrf.mxu0
    %631 = vmatprep.mubr.f32.mxu0 0.0
    %632 = vmatmul.mubr.f32.gmra.mxu0 %v319
    %v633 = vpop.f32.mrf.mxu0
    %v634 = vadd.f32 0.0, %v633
    %v635 = vpop.f32.mrf.mxu0
    %636 = vmatprep.mubr.f32.mxu0 0.0
    %637 = vmatmul.mubr.f32.gmra.mxu0 %v320
    %v638 = vpop.f32.mrf.mxu0
    %v639 = vadd.f32 0.0, %v638
    %v640 = vpop.f32.mrf.mxu0
    %641 = vdwg.mxu0
    %642 = vmatprep.subr.mxu0 0.0
    %643 = vmatpush1.msra.mxu0 %v539
    %644 = vmatprep.subr.mxu0 0.0
    %645 = vmatpush1.msra.mxu0 %v538
    %646 = vmatprep.subr.mxu0 0.0
    %647 = vmatpush1.msra.mxu0 %v537
    %648 = vmatprep.subr.mxu0 0.0
    %649 = vmatpush1.msra.mxu0 %v536
    %650 = vmatprep.subr.mxu0 0.0
    %651 = vmatpush1.msra.mxu0 %v535
    %652 = vmatprep.subr.mxu0 0.0
    %653 = vmatpush1.msra.mxu0 %v534
    %654 = vmatprep.subr.mxu0 0.0
    %655 = vmatpush1.msra.mxu0 %v533
    %656 = vmatprep.subr.mxu0 0.0
    %657 = vmatpush1.msra.mxu0 %v532
    %658 = vmatprep.subr.mxu0 0.0
    %659 = vmatpush1.msra.mxu0 %v531
    %660 = vmatprep.subr.mxu0 0.0
    %661 = vmatpush1.msra.mxu0 %v530
    %662 = vmatprep.subr.mxu0 0.0
    %663 = vmatpush1.msra.mxu0 %v529
    %664 = vmatprep.subr.mxu0 0.0
    %665 = vmatpush1.msra.mxu0 %v528
    %666 = vmatprep.subr.mxu0 0.0
    %667 = vmatpush1.msra.mxu0 %v527
    %668 = vmatprep.subr.mxu0 0.0
    %669 = vmatpush1.msra.mxu0 %v526
    %670 = vmatprep.subr.mxu0 0.0
    %671 = vmatpush1.msra.mxu0 %v525
    %672 = vmatprep.subr.mxu0 0.0
    %673 = vmatpush1.msra.mxu0 %v524
    %674 = vmatprep.subr.mxu0 0.0
    %675 = vmatpush2.msra.mxu0 0.0
    %676 = vmatprep.subr.mxu0 0.0
    %677 = vmatpush2.msra.mxu0 0.0
    %678 = vmatprep.subr.mxu0 0.0
    %679 = vmatpush2.msra.mxu0 0.0
    %680 = vmatprep.subr.mxu0 0.0
    %681 = vmatpush2.msra.mxu0 0.0
    %682 = vmatprep.subr.mxu0 0.0
    %683 = vmatpush2.msra.mxu0 0.0
    %684 = vmatprep.subr.mxu0 0.0
    %685 = vmatpush2.msra.mxu0 0.0
    %686 = vmatprep.subr.mxu0 0.0
    %687 = vmatpush2.msra.mxu0 0.0
    %688 = vmatprep.subr.mxu0 0.0
    %689 = vmatpush2.msra.mxu0 0.0
    %690 = vmatprep.subr.mxu0 0.0
    %691 = vmatpush2.msra.mxu0 0.0
    %692 = vmatprep.subr.mxu0 0.0
    %693 = vmatpush2.msra.mxu0 0.0
    %694 = vmatprep.subr.mxu0 0.0
    %695 = vmatpush2.msra.mxu0 0.0
    %696 = vmatprep.subr.mxu0 0.0
    %697 = vmatpush2.msra.mxu0 0.0
    %698 = vmatprep.subr.mxu0 0.0
    %699 = vmatpush2.msra.mxu0 0.0
    %700 = vmatprep.subr.mxu0 0.0
    %701 = vmatpush2.msra.mxu0 0.0
    %702 = vmatprep.subr.mxu0 0.0
    %703 = vmatpush2.msra.mxu0 0.0
    %704 = vmatprep.subr.mxu0 0.0
    %705 = vmatpush2.msra.mxu0 0.0
    %706 = vmatprep.mubr.f32.mxu0 0.0
    %707 = vmatmul.mubr.f32.gmra.mxu0 %v405
    %v708 = vpop.f32.mrf.mxu0
    %v709 = vadd.f32 %v624, %v708
    %v710 = vpop.f32.mrf.mxu0
    %711 = vmatprep.mubr.f32.mxu0 0.0
    %712 = vmatmul.mubr.f32.gmra.mxu0 %v410
    %v713 = vpop.f32.mrf.mxu0
    %v714 = vadd.f32 %v629, %v713
    %v715 = vpop.f32.mrf.mxu0
    %716 = vmatprep.mubr.f32.mxu0 0.0
    %717 = vmatmul.mubr.f32.gmra.mxu0 %v415
    %v718 = vpop.f32.mrf.mxu0
    %v719 = vadd.f32 %v634, %v718
    %v720 = vpop.f32.mrf.mxu0
    %721 = vmatprep.mubr.f32.mxu0 0.0
    %722 = vmatmul.mubr.f32.gmra.mxu0 %v420
    %v723 = vpop.f32.mrf.mxu0
    %v724 = vadd.f32 %v639, %v723
    %v725 = vpop.f32.mrf.mxu0
    %726 = vdwg.mxu0
    %s727 = scalar_lea.vmem [#allocation2], 256
    %v728 = vld [vmem:[%s727] sm:$0xff]
    %v729 = vld [vmem:[%s727 + $0x8] sm:$0xff]
    %v730 = vld [vmem:[%s727 + $0x10] sm:$0xff]
    %v731 = vld [vmem:[%s727 + $0x18] sm:$0xff]
    %v732 = vld [vmem:[%s727 + $0x20] sm:$0xff]
    %v733 = vld [vmem:[%s727 + $0x28] sm:$0xff]
    %v734 = vld [vmem:[%s727 + $0x30] sm:$0xff]
    %v735 = vld [vmem:[%s727 + $0x38] sm:$0xff]
    %v736 = vld [vmem:[%s727 + $0x40] sm:$0xff]
    %v737 = vld [vmem:[%s727 + $0x48] sm:$0xff]
    %v738 = vld [vmem:[%s727 + $0x50] sm:$0xff]
    %v739 = vld [vmem:[%s727 + $0x58] sm:$0xff]
    %v740 = vld [vmem:[%s727 + $0x60] sm:$0xff]
    %v741 = vld [vmem:[%s727 + $0x68] sm:$0xff]
    %v742 = vld [vmem:[%s727 + $0x70] sm:$0xff]
    %v743 = vld [vmem:[%s727 + $0x78] sm:$0xff]
    %744 = vmatprep.subr.mxu0 0.0
    %745 = vmatpush1.msra.mxu0 %v743
    %746 = vmatprep.subr.mxu0 0.0
    %747 = vmatpush1.msra.mxu0 %v742
    %748 = vmatprep.subr.mxu0 0.0
    %749 = vmatpush1.msra.mxu0 %v741
    %750 = vmatprep.subr.mxu0 0.0
    %751 = vmatpush1.msra.mxu0 %v740
    %752 = vmatprep.subr.mxu0 0.0
    %753 = vmatpush1.msra.mxu0 %v739
    %754 = vmatprep.subr.mxu0 0.0
    %755 = vmatpush1.msra.mxu0 %v738
    %756 = vmatprep.subr.mxu0 0.0
    %757 = vmatpush1.msra.mxu0 %v737
    %758 = vmatprep.subr.mxu0 0.0
    %759 = vmatpush1.msra.mxu0 %v736
    %760 = vmatprep.subr.mxu0 0.0
    %761 = vmatpush1.msra.mxu0 %v735
    %762 = vmatprep.subr.mxu0 0.0
    %763 = vmatpush1.msra.mxu0 %v734
    %764 = vmatprep.subr.mxu0 0.0
    %765 = vmatpush1.msra.mxu0 %v733
    %766 = vmatprep.subr.mxu0 0.0
    %767 = vmatpush1.msra.mxu0 %v732
    %768 = vmatprep.subr.mxu0 0.0
    %769 = vmatpush1.msra.mxu0 %v731
    %770 = vmatprep.subr.mxu0 0.0
    %771 = vmatpush1.msra.mxu0 %v730
    %772 = vmatprep.subr.mxu0 0.0
    %773 = vmatpush1.msra.mxu0 %v729
    %774 = vmatprep.subr.mxu0 0.0
    %775 = vmatpush1.msra.mxu0 %v728
    %776 = vmatprep.subr.mxu0 0.0
    %777 = vmatpush2.msra.mxu0 0.0
    %778 = vmatprep.subr.mxu0 0.0
    %779 = vmatpush2.msra.mxu0 0.0
    %780 = vmatprep.subr.mxu0 0.0
    %781 = vmatpush2.msra.mxu0 0.0
    %782 = vmatprep.subr.mxu0 0.0
    %783 = vmatpush2.msra.mxu0 0.0
    %784 = vmatprep.subr.mxu0 0.0
    %785 = vmatpush2.msra.mxu0 0.0
    %786 = vmatprep.subr.mxu0 0.0
    %787 = vmatpush2.msra.mxu0 0.0
    %788 = vmatprep.subr.mxu0 0.0
    %789 = vmatpush2.msra.mxu0 0.0
    %790 = vmatprep.subr.mxu0 0.0
    %791 = vmatpush2.msra.mxu0 0.0
    %792 = vmatprep.subr.mxu0 0.0
    %793 = vmatpush2.msra.mxu0 0.0
    %794 = vmatprep.subr.mxu0 0.0
    %795 = vmatpush2.msra.mxu0 0.0
    %796 = vmatprep.subr.mxu0 0.0
    %797 = vmatpush2.msra.mxu0 0.0
    %798 = vmatprep.subr.mxu0 0.0
    %799 = vmatpush2.msra.mxu0 0.0
    %800 = vmatprep.subr.mxu0 0.0
    %801 = vmatpush2.msra.mxu0 0.0
    %802 = vmatprep.subr.mxu0 0.0
    %803 = vmatpush2.msra.mxu0 0.0
    %804 = vmatprep.subr.mxu0 0.0
    %805 = vmatpush2.msra.mxu0 0.0
    %806 = vmatprep.subr.mxu0 0.0
    %807 = vmatpush2.msra.mxu0 0.0
    %808 = vmatprep.mubr.f32.mxu0 0.0
    %809 = vmatmul.mubr.f32.gmra.mxu0 %v506
    %v810 = vpop.f32.mrf.mxu0
    %v811 = vadd.f32 0.0, %v810
    %v812 = vpop.f32.mrf.mxu0
    %813 = vmatprep.mubr.f32.mxu0 0.0
    %814 = vmatmul.mubr.f32.gmra.mxu0 %v511
    %v815 = vpop.f32.mrf.mxu0
    %v816 = vadd.f32 0.0, %v815
    %v817 = vpop.f32.mrf.mxu0
    %818 = vmatprep.mubr.f32.mxu0 0.0
    %819 = vmatmul.mubr.f32.gmra.mxu0 %v516
    %v820 = vpop.f32.mrf.mxu0
    %v821 = vadd.f32 0.0, %v820
    %v822 = vpop.f32.mrf.mxu0
    %823 = vmatprep.mubr.f32.mxu0 0.0
    %824 = vmatmul.mubr.f32.gmra.mxu0 %v521
    %v825 = vpop.f32.mrf.mxu0
    %v826 = vadd.f32 0.0, %v825
    %v827 = vpop.f32.mrf.mxu0
    %828 = vdwg.mxu0
    %v829 = vadd.f32 %v709, %v811
    %v830 = vadd.f32 %v714, %v816
    %v831 = vadd.f32 %v719, %v821
    %v832 = vadd.f32 %v724, %v826
    %v833 = vld [vmem:[%s9] sm:$0x1]
    %v835 = vlaneseq
    %v836 = vshrl.u32 %v835, 7
    %v837 = vsub.s32 0, %v836
    %v838 = vrot.slane %v833, %v837
    %v840 = vmul.f32 %v829, %v838
    %v841 = vmul.f32 %v830, %v838
    %v842 = vmul.f32 %v831, %v838
    %v843 = vmul.f32 %v832, %v838
    %v844 = vld [vmem:[%s10] sm:$0x1]
    %v846 = vlaneseq
    %v847 = vshrl.u32 %v846, 7
    %v848 = vsub.s32 0, %v847
    %v849 = vrot.slane %v844, %v848
    %v851 = vadd.f32 %v840, %v849
    %v852 = vadd.f32 %v841, %v849
    %v853 = vadd.f32 %v842, %v849
    %v854 = vadd.f32 %v843, %v849
    %v855 = vmax.f32 %v851, 0.0
    %v856 = vmax.f32 %v852, 0.0
    %v857 = vmax.f32 %v853, 0.0
    %v858 = vmax.f32 %v854, 0.0
    %859 = vmatprep.subr.mxu0 0.0
    %860 = vmatpush1.msra.mxu0 0.0
    %861 = vmatprep.subr.mxu0 0.0
    %862 = vmatpush1.msra.mxu0 0.0
    %863 = vmatprep.subr.mxu0 0.0
    %864 = vmatpush1.msra.mxu0 0.0
    %865 = vmatprep.subr.mxu0 0.0
    %866 = vmatpush1.msra.mxu0 0.0
    %867 = vmatprep.subr.mxu0 0.0
    %868 = vmatpush1.msra.mxu0 0.0
    %869 = vmatprep.subr.mxu0 0.0
    %870 = vmatpush1.msra.mxu0 0.0
    %871 = vmatprep.subr.mxu0 0.0
    %872 = vmatpush1.msra.mxu0 0.0
    %873 = vmatprep.subr.mxu0 0.0
    %874 = vmatpush1.msra.mxu0 0.0
    %875 = vmatprep.subr.mxu0 0.0
    %876 = vmatpush1.msra.mxu0 0.0
    %877 = vmatprep.subr.mxu0 0.0
    %878 = vmatpush1.msra.mxu0 0.0
    %879 = vmatprep.subr.mxu0 0.0
    %880 = vmatpush1.msra.mxu0 0.0
    %881 = vmatprep.subr.mxu0 0.0
    %882 = vmatpush1.msra.mxu0 0.0
    %883 = vmatprep.subr.mxu0 0.0
    %884 = vmatpush1.msra.mxu0 %v858
    %885 = vmatprep.subr.mxu0 0.0
    %886 = vmatpush1.msra.mxu0 %v857
    %887 = vmatprep.subr.mxu0 0.0
    %888 = vmatpush1.msra.mxu0 %v856
    %889 = vmatprep.subr.mxu0 0.0
    %890 = vmatpush1.msra.mxu0 %v855
    %891 = vmatprep.subr.mxu0 0.0
    %892 = vmatpush2.msra.mxu0 0.0
    %893 = vmatprep.subr.mxu0 0.0
    %894 = vmatpush2.msra.mxu0 0.0
    %895 = vmatprep.subr.mxu0 0.0
    %896 = vmatpush2.msra.mxu0 0.0
    %897 = vmatprep.subr.mxu0 0.0
    %898 = vmatpush2.msra.mxu0 0.0
    %899 = vmatprep.subr.mxu0 0.0
    %900 = vmatpush2.msra.mxu0 0.0
    %901 = vmatprep.subr.mxu0 0.0
    %902 = vmatpush2.msra.mxu0 0.0
    %903 = vmatprep.subr.mxu0 0.0
    %904 = vmatpush2.msra.mxu0 0.0
    %905 = vmatprep.subr.mxu0 0.0
    %906 = vmatpush2.msra.mxu0 0.0
    %907 = vmatprep.subr.mxu0 0.0
    %908 = vmatpush2.msra.mxu0 0.0
    %909 = vmatprep.subr.mxu0 0.0
    %910 = vmatpush2.msra.mxu0 0.0
    %911 = vmatprep.subr.mxu0 0.0
    %912 = vmatpush2.msra.mxu0 0.0
    %913 = vmatprep.subr.mxu0 0.0
    %914 = vmatpush2.msra.mxu0 0.0
    %915 = vmatprep.subr.mxu0 0.0
    %916 = vmatpush2.msra.mxu0 0.0
    %917 = vmatprep.subr.mxu0 0.0
    %918 = vmatpush2.msra.mxu0 0.0
    %919 = vmatprep.subr.mxu0 0.0
    %920 = vmatpush2.msra.mxu0 0.0
    %921 = vmatprep.subr.mxu0 0.0
    %922 = vmatpush2.msra.mxu0 0.0
    %923 = vmatprep.mubr.f32.mxu0 0.0
    %924 = vmatmul.mubr.f32.gmra.mxu0 %v327
    %v925 = vpop.f32.mrf.mxu0
    %v926 = vadd.f32 0.0, %v925
    %v927 = vpop.f32.mrf.mxu0
    %928 = vmatprep.mubr.f32.mxu0 0.0
    %929 = vmatmul.mubr.f32.gmra.mxu0 %v330
    %v930 = vpop.f32.mrf.mxu0
    %v931 = vadd.f32 0.0, %v930
    %v932 = vpop.f32.mrf.mxu0
    %933 = vmatprep.mubr.f32.mxu0 0.0
    %934 = vmatmul.mubr.f32.gmra.mxu0 %v333
    %v935 = vpop.f32.mrf.mxu0
    %v936 = vadd.f32 0.0, %v935
    %v937 = vpop.f32.mrf.mxu0
    %938 = vmatprep.mubr.f32.mxu0 0.0
    %939 = vmatmul.mubr.f32.gmra.mxu0 %v336
    %v940 = vpop.f32.mrf.mxu0
    %v941 = vadd.f32 0.0, %v940
    %v942 = vpop.f32.mrf.mxu0
    %943 = vdwg.mxu0
    %944 = vmatprep.subr.mxu0 0.0
    %945 = vmatpush1.msra.mxu0 0.0
    %946 = vmatprep.subr.mxu0 0.0
    %947 = vmatpush1.msra.mxu0 0.0
    %948 = vmatprep.subr.mxu0 0.0
    %949 = vmatpush1.msra.mxu0 0.0
    %950 = vmatprep.subr.mxu0 0.0
    %951 = vmatpush1.msra.mxu0 0.0
    %952 = vmatprep.subr.mxu0 0.0
    %953 = vmatpush1.msra.mxu0 0.0
    %954 = vmatprep.subr.mxu0 0.0
    %955 = vmatpush1.msra.mxu0 0.0
    %956 = vmatprep.subr.mxu0 0.0
    %957 = vmatpush1.msra.mxu0 0.0
    %958 = vmatprep.subr.mxu0 0.0
    %959 = vmatpush1.msra.mxu0 0.0
    %960 = vmatprep.subr.mxu0 0.0
    %961 = vmatpush1.msra.mxu0 0.0
    %962 = vmatprep.subr.mxu0 0.0
    %963 = vmatpush1.msra.mxu0 0.0
    %964 = vmatprep.subr.mxu0 0.0
    %965 = vmatpush1.msra.mxu0 0.0
    %966 = vmatprep.subr.mxu0 0.0
    %967 = vmatpush1.msra.mxu0 0.0
    %968 = vmatprep.subr.mxu0 0.0
    %969 = vmatpush1.msra.mxu0 %v858
    %970 = vmatprep.subr.mxu0 0.0
    %971 = vmatpush1.msra.mxu0 %v857
    %972 = vmatprep.subr.mxu0 0.0
    %973 = vmatpush1.msra.mxu0 %v856
    %974 = vmatprep.subr.mxu0 0.0
    %975 = vmatpush1.msra.mxu0 %v855
    %976 = vmatprep.subr.mxu0 0.0
    %977 = vmatpush2.msra.mxu0 0.0
    %978 = vmatprep.subr.mxu0 0.0
    %979 = vmatpush2.msra.mxu0 0.0
    %980 = vmatprep.subr.mxu0 0.0
    %981 = vmatpush2.msra.mxu0 0.0
    %982 = vmatprep.subr.mxu0 0.0
    %983 = vmatpush2.msra.mxu0 0.0
    %984 = vmatprep.subr.mxu0 0.0
    %985 = vmatpush2.msra.mxu0 0.0
    %986 = vmatprep.subr.mxu0 0.0
    %987 = vmatpush2.msra.mxu0 0.0
    %988 = vmatprep.subr.mxu0 0.0
    %989 = vmatpush2.msra.mxu0 0.0
    %990 = vmatprep.subr.mxu0 0.0
    %991 = vmatpush2.msra.mxu0 0.0
    %992 = vmatprep.subr.mxu0 0.0
    %993 = vmatpush2.msra.mxu0 0.0
    %994 = vmatprep.subr.mxu0 0.0
    %995 = vmatpush2.msra.mxu0 0.0
    %996 = vmatprep.subr.mxu0 0.0
    %997 = vmatpush2.msra.mxu0 0.0
    %998 = vmatprep.subr.mxu0 0.0
    %999 = vmatpush2.msra.mxu0 0.0
    %1000 = vmatprep.subr.mxu0 0.0
    %1001 = vmatpush2.msra.mxu0 0.0
    %1002 = vmatprep.subr.mxu0 0.0
    %1003 = vmatpush2.msra.mxu0 0.0
    %1004 = vmatprep.subr.mxu0 0.0
    %1005 = vmatpush2.msra.mxu0 0.0
    %1006 = vmatprep.subr.mxu0 0.0
    %1007 = vmatpush2.msra.mxu0 0.0
    %1008 = vmatprep.mubr.f32.mxu0 0.0
    %1009 = vmatmul.mubr.f32.gmra.mxu0 %v428
    %v1010 = vpop.f32.mrf.mxu0
    %v1011 = vadd.f32 0.0, %v1010
    %v1012 = vpop.f32.mrf.mxu0
    %1013 = vmatprep.mubr.f32.mxu0 0.0
    %1014 = vmatmul.mubr.f32.gmra.mxu0 %v431
    %v1015 = vpop.f32.mrf.mxu0
    %v1016 = vadd.f32 0.0, %v1015
    %v1017 = vpop.f32.mrf.mxu0
    %1018 = vmatprep.mubr.f32.mxu0 0.0
    %1019 = vmatmul.mubr.f32.gmra.mxu0 %v434
    %v1020 = vpop.f32.mrf.mxu0
    %v1021 = vadd.f32 0.0, %v1020
    %v1022 = vpop.f32.mrf.mxu0
    %1023 = vmatprep.mubr.f32.mxu0 0.0
    %1024 = vmatmul.mubr.f32.gmra.mxu0 %v437
    %v1025 = vpop.f32.mrf.mxu0
    %v1026 = vadd.f32 0.0, %v1025
    %v1027 = vpop.f32.mrf.mxu0
    %1028 = vdwg.mxu0
    %v1029 = vld [vmem:[#allocation5] sm:$0xff]
    %v1030 = vld [vmem:[#allocation5 + $0x8] sm:$0xff]
    %v1031 = vld [vmem:[#allocation5 + $0x10] sm:$0xff]
    %v1032 = vld [vmem:[#allocation5 + $0x18] sm:$0xff]
    %v1033 = vld [vmem:[#allocation5 + $0x20] sm:$0xff]
    %v1034 = vld [vmem:[#allocation5 + $0x28] sm:$0xff]
    %v1035 = vld [vmem:[#allocation5 + $0x30] sm:$0xff]
    %v1036 = vld [vmem:[#allocation5 + $0x38] sm:$0xff]
    %v1037 = vld [vmem:[#allocation5 + $0x40] sm:$0xff]
    %v1038 = vld [vmem:[#allocation5 + $0x48] sm:$0xff]
    %v1039 = vld [vmem:[#allocation5 + $0x50] sm:$0xff]
    %v1040 = vld [vmem:[#allocation5 + $0x58] sm:$0xff]
    %v1041 = vld [vmem:[#allocation5 + $0x60] sm:$0xff]
    %v1042 = vld [vmem:[#allocation5 + $0x68] sm:$0xff]
    %v1043 = vld [vmem:[#allocation5 + $0x70] sm:$0xff]
    %v1044 = vld [vmem:[#allocation5 + $0x78] sm:$0xff]
    %s1045 = scalar_lea.vmem [#allocation5], 128
    %v1046 = vld [vmem:[%s1045] sm:$0xff]
    %v1047 = vld [vmem:[%s1045 + $0x8] sm:$0xff]
    %v1048 = vld [vmem:[%s1045 + $0x10] sm:$0xff]
    %v1049 = vld [vmem:[%s1045 + $0x18] sm:$0xff]
    %v1050 = vld [vmem:[%s1045 + $0x20] sm:$0xff]
    %v1051 = vld [vmem:[%s1045 + $0x28] sm:$0xff]
    %v1052 = vld [vmem:[%s1045 + $0x30] sm:$0xff]
    %v1053 = vld [vmem:[%s1045 + $0x38] sm:$0xff]
    %v1054 = vld [vmem:[%s1045 + $0x40] sm:$0xff]
    %v1055 = vld [vmem:[%s1045 + $0x48] sm:$0xff]
    %v1056 = vld [vmem:[%s1045 + $0x50] sm:$0xff]
    %v1057 = vld [vmem:[%s1045 + $0x58] sm:$0xff]
    %v1058 = vld [vmem:[%s1045 + $0x60] sm:$0xff]
    %v1059 = vld [vmem:[%s1045 + $0x68] sm:$0xff]
    %v1060 = vld [vmem:[%s1045 + $0x70] sm:$0xff]
    %v1061 = vld [vmem:[%s1045 + $0x78] sm:$0xff]
    %1062 = vmatprep.subr.mxu0 0.0
    %1063 = vmatpush1.msra.mxu0 %v1061
    %1064 = vmatprep.subr.mxu0 0.0
    %1065 = vmatpush1.msra.mxu0 %v1060
    %1066 = vmatprep.subr.mxu0 0.0
    %1067 = vmatpush1.msra.mxu0 %v1059
    %1068 = vmatprep.subr.mxu0 0.0
    %1069 = vmatpush1.msra.mxu0 %v1058
    %1070 = vmatprep.subr.mxu0 0.0
    %1071 = vmatpush1.msra.mxu0 %v1057
    %1072 = vmatprep.subr.mxu0 0.0
    %1073 = vmatpush1.msra.mxu0 %v1056
    %1074 = vmatprep.subr.mxu0 0.0
    %1075 = vmatpush1.msra.mxu0 %v1055
    %1076 = vmatprep.subr.mxu0 0.0
    %1077 = vmatpush1.msra.mxu0 %v1054
    %1078 = vmatprep.subr.mxu0 0.0
    %1079 = vmatpush1.msra.mxu0 %v1053
    %1080 = vmatprep.subr.mxu0 0.0
    %1081 = vmatpush1.msra.mxu0 %v1052
    %1082 = vmatprep.subr.mxu0 0.0
    %1083 = vmatpush1.msra.mxu0 %v1051
    %1084 = vmatprep.subr.mxu0 0.0
    %1085 = vmatpush1.msra.mxu0 %v1050
    %1086 = vmatprep.subr.mxu0 0.0
    %1087 = vmatpush1.msra.mxu0 %v1049
    %1088 = vmatprep.subr.mxu0 0.0
    %1089 = vmatpush1.msra.mxu0 %v1048
    %1090 = vmatprep.subr.mxu0 0.0
    %1091 = vmatpush1.msra.mxu0 %v1047
    %1092 = vmatprep.subr.mxu0 0.0
    %1093 = vmatpush1.msra.mxu0 %v1046
    %1094 = vmatprep.subr.mxu0 0.0
    %1095 = vmatpush2.msra.mxu0 0.0
    %1096 = vmatprep.subr.mxu0 0.0
    %1097 = vmatpush2.msra.mxu0 0.0
    %1098 = vmatprep.subr.mxu0 0.0
    %1099 = vmatpush2.msra.mxu0 0.0
    %1100 = vmatprep.subr.mxu0 0.0
    %1101 = vmatpush2.msra.mxu0 0.0
    %1102 = vmatprep.subr.mxu0 0.0
    %1103 = vmatpush2.msra.mxu0 0.0
    %1104 = vmatprep.subr.mxu0 0.0
    %1105 = vmatpush2.msra.mxu0 0.0
    %1106 = vmatprep.subr.mxu0 0.0
    %1107 = vmatpush2.msra.mxu0 0.0
    %1108 = vmatprep.subr.mxu0 0.0
    %1109 = vmatpush2.msra.mxu0 0.0
    %1110 = vmatprep.subr.mxu0 0.0
    %1111 = vmatpush2.msra.mxu0 0.0
    %1112 = vmatprep.subr.mxu0 0.0
    %1113 = vmatpush2.msra.mxu0 0.0
    %1114 = vmatprep.subr.mxu0 0.0
    %1115 = vmatpush2.msra.mxu0 0.0
    %1116 = vmatprep.subr.mxu0 0.0
    %1117 = vmatpush2.msra.mxu0 0.0
    %1118 = vmatprep.subr.mxu0 0.0
    %1119 = vmatpush2.msra.mxu0 0.0
    %1120 = vmatprep.subr.mxu0 0.0
    %1121 = vmatpush2.msra.mxu0 0.0
    %1122 = vmatprep.subr.mxu0 0.0
    %1123 = vmatpush2.msra.mxu0 0.0
    %1124 = vmatprep.subr.mxu0 0.0
    %1125 = vmatpush2.msra.mxu0 0.0
    %1126 = vmatprep.mubr.f32.mxu0 0.0
    %1127 = vmatmul.mubr.f32.gmra.mxu0 %v855
    %v1128 = vpop.f32.mrf.mxu0
    %v1129 = vadd.f32 0.0, %v1128
    %v1130 = vpop.f32.mrf.mxu0
    %1131 = vmatprep.mubr.f32.mxu0 0.0
    %1132 = vmatmul.mubr.f32.gmra.mxu0 %v856
    %v1133 = vpop.f32.mrf.mxu0
    %v1134 = vadd.f32 0.0, %v1133
    %v1135 = vpop.f32.mrf.mxu0
    %1136 = vmatprep.mubr.f32.mxu0 0.0
    %1137 = vmatmul.mubr.f32.gmra.mxu0 %v857
    %v1138 = vpop.f32.mrf.mxu0
    %v1139 = vadd.f32 0.0, %v1138
    %v1140 = vpop.f32.mrf.mxu0
    %1141 = vmatprep.mubr.f32.mxu0 0.0
    %1142 = vmatmul.mubr.f32.gmra.mxu0 %v858
    %v1143 = vpop.f32.mrf.mxu0
    %v1144 = vadd.f32 0.0, %v1143
    %v1145 = vpop.f32.mrf.mxu0
    %1146 = vdwg.mxu0
    %1147 = vmatprep.subr.mxu0 0.0
    %1148 = vmatpush1.msra.mxu0 %v1044
    %1149 = vmatprep.subr.mxu0 0.0
    %1150 = vmatpush1.msra.mxu0 %v1043
    %1151 = vmatprep.subr.mxu0 0.0
    %1152 = vmatpush1.msra.mxu0 %v1042
    %1153 = vmatprep.subr.mxu0 0.0
    %1154 = vmatpush1.msra.mxu0 %v1041
    %1155 = vmatprep.subr.mxu0 0.0
    %1156 = vmatpush1.msra.mxu0 %v1040
    %1157 = vmatprep.subr.mxu0 0.0
    %1158 = vmatpush1.msra.mxu0 %v1039
    %1159 = vmatprep.subr.mxu0 0.0
    %1160 = vmatpush1.msra.mxu0 %v1038
    %1161 = vmatprep.subr.mxu0 0.0
    %1162 = vmatpush1.msra.mxu0 %v1037
    %1163 = vmatprep.subr.mxu0 0.0
    %1164 = vmatpush1.msra.mxu0 %v1036
    %1165 = vmatprep.subr.mxu0 0.0
    %1166 = vmatpush1.msra.mxu0 %v1035
    %1167 = vmatprep.subr.mxu0 0.0
    %1168 = vmatpush1.msra.mxu0 %v1034
    %1169 = vmatprep.subr.mxu0 0.0
    %1170 = vmatpush1.msra.mxu0 %v1033
    %1171 = vmatprep.subr.mxu0 0.0
    %1172 = vmatpush1.msra.mxu0 %v1032
    %1173 = vmatprep.subr.mxu0 0.0
    %1174 = vmatpush1.msra.mxu0 %v1031
    %1175 = vmatprep.subr.mxu0 0.0
    %1176 = vmatpush1.msra.mxu0 %v1030
    %1177 = vmatprep.subr.mxu0 0.0
    %1178 = vmatpush1.msra.mxu0 %v1029
    %1179 = vmatprep.subr.mxu0 0.0
    %1180 = vmatpush2.msra.mxu0 0.0
    %1181 = vmatprep.subr.mxu0 0.0
    %1182 = vmatpush2.msra.mxu0 0.0
    %1183 = vmatprep.subr.mxu0 0.0
    %1184 = vmatpush2.msra.mxu0 0.0
    %1185 = vmatprep.subr.mxu0 0.0
    %1186 = vmatpush2.msra.mxu0 0.0
    %1187 = vmatprep.subr.mxu0 0.0
    %1188 = vmatpush2.msra.mxu0 0.0
    %1189 = vmatprep.subr.mxu0 0.0
    %1190 = vmatpush2.msra.mxu0 0.0
    %1191 = vmatprep.subr.mxu0 0.0
    %1192 = vmatpush2.msra.mxu0 0.0
    %1193 = vmatprep.subr.mxu0 0.0
    %1194 = vmatpush2.msra.mxu0 0.0
    %1195 = vmatprep.subr.mxu0 0.0
    %1196 = vmatpush2.msra.mxu0 0.0
    %1197 = vmatprep.subr.mxu0 0.0
    %1198 = vmatpush2.msra.mxu0 0.0
    %1199 = vmatprep.subr.mxu0 0.0
    %1200 = vmatpush2.msra.mxu0 0.0
    %1201 = vmatprep.subr.mxu0 0.0
    %1202 = vmatpush2.msra.mxu0 0.0
    %1203 = vmatprep.subr.mxu0 0.0
    %1204 = vmatpush2.msra.mxu0 0.0
    %1205 = vmatprep.subr.mxu0 0.0
    %1206 = vmatpush2.msra.mxu0 0.0
    %1207 = vmatprep.subr.mxu0 0.0
    %1208 = vmatpush2.msra.mxu0 0.0
    %1209 = vmatprep.subr.mxu0 0.0
    %1210 = vmatpush2.msra.mxu0 0.0
    %1211 = vmatprep.mubr.f32.mxu0 0.0
    %1212 = vmatmul.mubr.f32.gmra.mxu0 %v926
    %v1213 = vpop.f32.mrf.mxu0
    %v1214 = vadd.f32 %v1129, %v1213
    %v1215 = vpop.f32.mrf.mxu0
    %1216 = vmatprep.mubr.f32.mxu0 0.0
    %1217 = vmatmul.mubr.f32.gmra.mxu0 %v931
    %v1218 = vpop.f32.mrf.mxu0
    %v1219 = vadd.f32 %v1134, %v1218
    %v1220 = vpop.f32.mrf.mxu0
    %1221 = vmatprep.mubr.f32.mxu0 0.0
    %1222 = vmatmul.mubr.f32.gmra.mxu0 %v936
    %v1223 = vpop.f32.mrf.mxu0
    %v1224 = vadd.f32 %v1139, %v1223
    %v1225 = vpop.f32.mrf.mxu0
    %1226 = vmatprep.mubr.f32.mxu0 0.0
    %1227 = vmatmul.mubr.f32.gmra.mxu0 %v941
    %v1228 = vpop.f32.mrf.mxu0
    %v1229 = vadd.f32 %v1144, %v1228
    %v1230 = vpop.f32.mrf.mxu0
    %1231 = vdwg.mxu0
    %s1232 = scalar_lea.vmem [#allocation5], 256
    %v1233 = vld [vmem:[%s1232] sm:$0xff]
    %v1234 = vld [vmem:[%s1232 + $0x8] sm:$0xff]
    %v1235 = vld [vmem:[%s1232 + $0x10] sm:$0xff]
    %v1236 = vld [vmem:[%s1232 + $0x18] sm:$0xff]
    %v1237 = vld [vmem:[%s1232 + $0x20] sm:$0xff]
    %v1238 = vld [vmem:[%s1232 + $0x28] sm:$0xff]
    %v1239 = vld [vmem:[%s1232 + $0x30] sm:$0xff]
    %v1240 = vld [vmem:[%s1232 + $0x38] sm:$0xff]
    %v1241 = vld [vmem:[%s1232 + $0x40] sm:$0xff]
    %v1242 = vld [vmem:[%s1232 + $0x48] sm:$0xff]
    %v1243 = vld [vmem:[%s1232 + $0x50] sm:$0xff]
    %v1244 = vld [vmem:[%s1232 + $0x58] sm:$0xff]
    %v1245 = vld [vmem:[%s1232 + $0x60] sm:$0xff]
    %v1246 = vld [vmem:[%s1232 + $0x68] sm:$0xff]
    %v1247 = vld [vmem:[%s1232 + $0x70] sm:$0xff]
    %v1248 = vld [vmem:[%s1232 + $0x78] sm:$0xff]
    %1249 = vmatprep.subr.mxu0 0.0
    %1250 = vmatpush1.msra.mxu0 %v1248
    %1251 = vmatprep.subr.mxu0 0.0
    %1252 = vmatpush1.msra.mxu0 %v1247
    %1253 = vmatprep.subr.mxu0 0.0
    %1254 = vmatpush1.msra.mxu0 %v1246
    %1255 = vmatprep.subr.mxu0 0.0
    %1256 = vmatpush1.msra.mxu0 %v1245
    %1257 = vmatprep.subr.mxu0 0.0
    %1258 = vmatpush1.msra.mxu0 %v1244
    %1259 = vmatprep.subr.mxu0 0.0
    %1260 = vmatpush1.msra.mxu0 %v1243
    %1261 = vmatprep.subr.mxu0 0.0
    %1262 = vmatpush1.msra.mxu0 %v1242
    %1263 = vmatprep.subr.mxu0 0.0
    %1264 = vmatpush1.msra.mxu0 %v1241
    %1265 = vmatprep.subr.mxu0 0.0
    %1266 = vmatpush1.msra.mxu0 %v1240
    %1267 = vmatprep.subr.mxu0 0.0
    %1268 = vmatpush1.msra.mxu0 %v1239
    %1269 = vmatprep.subr.mxu0 0.0
    %1270 = vmatpush1.msra.mxu0 %v1238
    %1271 = vmatprep.subr.mxu0 0.0
    %1272 = vmatpush1.msra.mxu0 %v1237
    %1273 = vmatprep.subr.mxu0 0.0
    %1274 = vmatpush1.msra.mxu0 %v1236
    %1275 = vmatprep.subr.mxu0 0.0
    %1276 = vmatpush1.msra.mxu0 %v1235
    %1277 = vmatprep.subr.mxu0 0.0
    %1278 = vmatpush1.msra.mxu0 %v1234
    %1279 = vmatprep.subr.mxu0 0.0
    %1280 = vmatpush1.msra.mxu0 %v1233
    %1281 = vmatprep.subr.mxu0 0.0
    %1282 = vmatpush2.msra.mxu0 0.0
    %1283 = vmatprep.subr.mxu0 0.0
    %1284 = vmatpush2.msra.mxu0 0.0
    %1285 = vmatprep.subr.mxu0 0.0
    %1286 = vmatpush2.msra.mxu0 0.0
    %1287 = vmatprep.subr.mxu0 0.0
    %1288 = vmatpush2.msra.mxu0 0.0
    %1289 = vmatprep.subr.mxu0 0.0
    %1290 = vmatpush2.msra.mxu0 0.0
    %1291 = vmatprep.subr.mxu0 0.0
    %1292 = vmatpush2.msra.mxu0 0.0
    %1293 = vmatprep.subr.mxu0 0.0
    %1294 = vmatpush2.msra.mxu0 0.0
    %1295 = vmatprep.subr.mxu0 0.0
    %1296 = vmatpush2.msra.mxu0 0.0
    %1297 = vmatprep.subr.mxu0 0.0
    %1298 = vmatpush2.msra.mxu0 0.0
    %1299 = vmatprep.subr.mxu0 0.0
    %1300 = vmatpush2.msra.mxu0 0.0
    %1301 = vmatprep.subr.mxu0 0.0
    %1302 = vmatpush2.msra.mxu0 0.0
    %1303 = vmatprep.subr.mxu0 0.0
    %1304 = vmatpush2.msra.mxu0 0.0
    %1305 = vmatprep.subr.mxu0 0.0
    %1306 = vmatpush2.msra.mxu0 0.0
    %1307 = vmatprep.subr.mxu0 0.0
    %1308 = vmatpush2.msra.mxu0 0.0
    %1309 = vmatprep.subr.mxu0 0.0
    %1310 = vmatpush2.msra.mxu0 0.0
    %1311 = vmatprep.subr.mxu0 0.0
    %1312 = vmatpush2.msra.mxu0 0.0
    %1313 = vmatprep.mubr.f32.mxu0 0.0
    %1314 = vmatmul.mubr.f32.gmra.mxu0 %v1011
    %v1315 = vpop.f32.mrf.mxu0
    %v1316 = vadd.f32 0.0, %v1315
    %v1317 = vpop.f32.mrf.mxu0
    %1318 = vmatprep.mubr.f32.mxu0 0.0
    %1319 = vmatmul.mubr.f32.gmra.mxu0 %v1016
    %v1320 = vpop.f32.mrf.mxu0
    %v1321 = vadd.f32 0.0, %v1320
    %v1322 = vpop.f32.mrf.mxu0
    %1323 = vmatprep.mubr.f32.mxu0 0.0
    %1324 = vmatmul.mubr.f32.gmra.mxu0 %v1021
    %v1325 = vpop.f32.mrf.mxu0
    %v1326 = vadd.f32 0.0, %v1325
    %v1327 = vpop.f32.mrf.mxu0
    %1328 = vmatprep.mubr.f32.mxu0 0.0
    %1329 = vmatmul.mubr.f32.gmra.mxu0 %v1026
    %v1330 = vpop.f32.mrf.mxu0
    %v1331 = vadd.f32 0.0, %v1330
    %v1332 = vpop.f32.mrf.mxu0
    %1333 = vdwg.mxu0
    %v1334 = vadd.f32 %v1214, %v1316
    %v1335 = vadd.f32 %v1219, %v1321
    %v1336 = vadd.f32 %v1224, %v1326
    %v1337 = vadd.f32 %v1229, %v1331
    %v1338 = vld [vmem:[%s11] sm:$0x3]
    %v1340 = vsel %vm325, %v1338, 0
    %1342 = vmatprep.subr.mxu0 0.0
    %1343 = vmatpush1.msra.mxu0 0.0
    %1344 = vmatprep.subr.mxu0 0.0
    %1345 = vmatpush1.msra.mxu0 0.0
    %1346 = vmatprep.subr.mxu0 0.0
    %1347 = vmatpush1.msra.mxu0 0.0
    %1348 = vmatprep.subr.mxu0 0.0
    %1349 = vmatpush1.msra.mxu0 0.0
    %1350 = vmatprep.subr.mxu0 0.0
    %1351 = vmatpush1.msra.mxu0 0.0
    %1352 = vmatprep.subr.mxu0 0.0
    %1353 = vmatpush1.msra.mxu0 0.0
    %1354 = vmatprep.subr.mxu0 0.0
    %1355 = vmatpush1.msra.mxu0 0.0
    %1356 = vmatprep.subr.mxu0 0.0
    %1357 = vmatpush1.msra.mxu0 0.0
    %1358 = vmatprep.subr.mxu0 0.0
    %1359 = vmatpush1.msra.mxu0 0.0
    %1360 = vmatprep.subr.mxu0 0.0
    %1361 = vmatpush1.msra.mxu0 0.0
    %1362 = vmatprep.subr.mxu0 0.0
    %1363 = vmatpush1.msra.mxu0 0.0
    %1364 = vmatprep.subr.mxu0 0.0
    %1365 = vmatpush1.msra.mxu0 0.0
    %1366 = vmatprep.subr.mxu0 0.0
    %1367 = vmatpush1.msra.mxu0 %v1337
    %1368 = vmatprep.subr.mxu0 0.0
    %1369 = vmatpush1.msra.mxu0 %v1336
    %1370 = vmatprep.subr.mxu0 0.0
    %1371 = vmatpush1.msra.mxu0 %v1335
    %1372 = vmatprep.subr.mxu0 0.0
    %1373 = vmatpush1.msra.mxu0 %v1334
    %1374 = vmatprep.subr.mxu0 0.0
    %1375 = vmatpush2.msra.mxu0 0.0
    %1376 = vmatprep.subr.mxu0 0.0
    %1377 = vmatpush2.msra.mxu0 0.0
    %1378 = vmatprep.subr.mxu0 0.0
    %1379 = vmatpush2.msra.mxu0 0.0
    %1380 = vmatprep.subr.mxu0 0.0
    %1381 = vmatpush2.msra.mxu0 0.0
    %1382 = vmatprep.subr.mxu0 0.0
    %1383 = vmatpush2.msra.mxu0 0.0
    %1384 = vmatprep.subr.mxu0 0.0
    %1385 = vmatpush2.msra.mxu0 0.0
    %1386 = vmatprep.subr.mxu0 0.0
    %1387 = vmatpush2.msra.mxu0 0.0
    %1388 = vmatprep.subr.mxu0 0.0
    %1389 = vmatpush2.msra.mxu0 0.0
    %1390 = vmatprep.subr.mxu0 0.0
    %1391 = vmatpush2.msra.mxu0 0.0
    %1392 = vmatprep.subr.mxu0 0.0
    %1393 = vmatpush2.msra.mxu0 0.0
    %1394 = vmatprep.subr.mxu0 0.0
    %1395 = vmatpush2.msra.mxu0 0.0
    %1396 = vmatprep.subr.mxu0 0.0
    %1397 = vmatpush2.msra.mxu0 0.0
    %1398 = vmatprep.subr.mxu0 0.0
    %1399 = vmatpush2.msra.mxu0 0.0
    %1400 = vmatprep.subr.mxu0 0.0
    %1401 = vmatpush2.msra.mxu0 0.0
    %1402 = vmatprep.subr.mxu0 0.0
    %1403 = vmatpush2.msra.mxu0 0.0
    %1404 = vmatprep.subr.mxu0 0.0
    %1405 = vmatpush2.msra.mxu0 0.0
    %1406 = vmatprep.mubr.f32.mxu0 0.0
    %1407 = vmatmul.mubr.f32.gmra.mxu0 %v1340
    %v1408 = vpop.f32.mrf.mxu0
    %v1409 = vadd.f32 0.0, %v1408
    %v1410 = vpop.f32.mrf.mxu0
    %1411 = vdwg.mxu0
    %v1412 = vld [vmem:[%s13] sm:$0xff]
    %v1413 = vld [vmem:[%s13 + $0x8] sm:$0xff]
    %v1414 = vld [vmem:[%s13 + $0x10] sm:$0xff]
    %v1415 = vld [vmem:[%s13 + $0x18] sm:$0xff]
    %v1416 = vld [vmem:[%s13 + $0x20] sm:$0xff]
    %v1417 = vld [vmem:[%s13 + $0x28] sm:$0xff]
    %v1418 = vld [vmem:[%s13 + $0x30] sm:$0xff]
    %v1419 = vld [vmem:[%s13 + $0x38] sm:$0xff]
    %v1420 = vld [vmem:[%s13 + $0x40] sm:$0xff]
    %v1421 = vld [vmem:[%s13 + $0x48] sm:$0xff]
    %v1422 = vld [vmem:[%s13 + $0x50] sm:$0xff]
    %v1423 = vld [vmem:[%s13 + $0x58] sm:$0xff]
    %v1424 = vld [vmem:[%s13 + $0x60] sm:$0xff]
    %v1425 = vld [vmem:[%s13 + $0x68] sm:$0xff]
    %v1426 = vld [vmem:[%s13 + $0x70] sm:$0xff]
    %v1427 = vld [vmem:[%s13 + $0x78] sm:$0xff]
    %v1428 = vld [vmem:[%s14] sm:$0x1]
    %v1430 = vlaneseq
    %v1431 = vshrl.u32 %v1430, 7
    %v1432 = vsub.s32 0, %v1431
    %v1433 = vrot.slane %v1428, %v1432
    %1435 = vmatprep.subr.mxu0 0.0
    %1436 = vmatpush1.msra.mxu0 %v1427
    %1437 = vmatprep.subr.mxu0 0.0
    %1438 = vmatpush1.msra.mxu0 %v1426
    %1439 = vmatprep.subr.mxu0 0.0
    %1440 = vmatpush1.msra.mxu0 %v1425
    %1441 = vmatprep.subr.mxu0 0.0
    %1442 = vmatpush1.msra.mxu0 %v1424
    %1443 = vmatprep.subr.mxu0 0.0
    %1444 = vmatpush1.msra.mxu0 %v1423
    %1445 = vmatprep.subr.mxu0 0.0
    %1446 = vmatpush1.msra.mxu0 %v1422
    %1447 = vmatprep.subr.mxu0 0.0
    %1448 = vmatpush1.msra.mxu0 %v1421
    %1449 = vmatprep.subr.mxu0 0.0
    %1450 = vmatpush1.msra.mxu0 %v1420
    %1451 = vmatprep.subr.mxu0 0.0
    %1452 = vmatpush1.msra.mxu0 %v1419
    %1453 = vmatprep.subr.mxu0 0.0
    %1454 = vmatpush1.msra.mxu0 %v1418
    %1455 = vmatprep.subr.mxu0 0.0
    %1456 = vmatpush1.msra.mxu0 %v1417
    %1457 = vmatprep.subr.mxu0 0.0
    %1458 = vmatpush1.msra.mxu0 %v1416
    %1459 = vmatprep.subr.mxu0 0.0
    %1460 = vmatpush1.msra.mxu0 %v1415
    %1461 = vmatprep.subr.mxu0 0.0
    %1462 = vmatpush1.msra.mxu0 %v1414
    %1463 = vmatprep.subr.mxu0 0.0
    %1464 = vmatpush1.msra.mxu0 %v1413
    %1465 = vmatprep.subr.mxu0 0.0
    %1466 = vmatpush1.msra.mxu0 %v1412
    %1467 = vmatprep.subr.mxu0 0.0
    %1468 = vmatpush2.msra.mxu0 0.0
    %1469 = vmatprep.subr.mxu0 0.0
    %1470 = vmatpush2.msra.mxu0 0.0
    %1471 = vmatprep.subr.mxu0 0.0
    %1472 = vmatpush2.msra.mxu0 0.0
    %1473 = vmatprep.subr.mxu0 0.0
    %1474 = vmatpush2.msra.mxu0 0.0
    %1475 = vmatprep.subr.mxu0 0.0
    %1476 = vmatpush2.msra.mxu0 0.0
    %1477 = vmatprep.subr.mxu0 0.0
    %1478 = vmatpush2.msra.mxu0 0.0
    %1479 = vmatprep.subr.mxu0 0.0
    %1480 = vmatpush2.msra.mxu0 0.0
    %1481 = vmatprep.subr.mxu0 0.0
    %1482 = vmatpush2.msra.mxu0 0.0
    %1483 = vmatprep.subr.mxu0 0.0
    %1484 = vmatpush2.msra.mxu0 0.0
    %1485 = vmatprep.subr.mxu0 0.0
    %1486 = vmatpush2.msra.mxu0 0.0
    %1487 = vmatprep.subr.mxu0 0.0
    %1488 = vmatpush2.msra.mxu0 0.0
    %1489 = vmatprep.subr.mxu0 0.0
    %1490 = vmatpush2.msra.mxu0 0.0
    %1491 = vmatprep.subr.mxu0 0.0
    %1492 = vmatpush2.msra.mxu0 0.0
    %1493 = vmatprep.subr.mxu0 0.0
    %1494 = vmatpush2.msra.mxu0 0.0
    %1495 = vmatprep.subr.mxu0 0.0
    %1496 = vmatpush2.msra.mxu0 0.0
    %1497 = vmatprep.subr.mxu0 0.0
    %1498 = vmatpush2.msra.mxu0 0.0
    %1499 = vmatprep.mubr.f32.mxu0 0.0
    %1500 = vmatmul.mubr.f32.gmra.mxu0 %v1409
    %v1501 = vpop.f32.mrf.mxu0
    %v1502 = vadd.f32 %v1433, %v1501
    %v1503 = vpop.f32.mrf.mxu0
    %1504 = vdwg.mxu0
    %v1505 = vmax.f32 %v1502, 0.0
    %v1506 = vld [vmem:[%s15] sm:$0xf]
    %v1507 = vld [vmem:[%s16] sm:$0x1]
    %v1509 = vlaneseq
    %v1510 = vshrl.u32 %v1509, 7
    %v1511 = vsub.s32 0, %v1510
    %v1512 = vrot.slane %v1507, %v1511
    %vm1514 = vcmask 31744
    %v1516 = vsel %vm1514, %v1505, 0
    %vm1518 = vcmask 1043456
    %v1520 = vsel %vm1518, %v1506, 0
    %1522 = vmatprep.subr.mxu0 0.0
    %1523 = vmatpush1.msra.mxu0 0.0
    %1524 = vmatprep.subr.mxu0 0.0
    %1525 = vmatpush1.msra.mxu0 0.0
    %1526 = vmatprep.subr.mxu0 0.0
    %1527 = vmatpush1.msra.mxu0 0.0
    %1528 = vmatprep.subr.mxu0 0.0
    %1529 = vmatpush1.msra.mxu0 0.0
    %1530 = vmatprep.subr.mxu0 0.0
    %1531 = vmatpush1.msra.mxu0 0.0
    %1532 = vmatprep.subr.mxu0 0.0
    %1533 = vmatpush1.msra.mxu0 0.0
    %1534 = vmatprep.subr.mxu0 0.0
    %1535 = vmatpush1.msra.mxu0 0.0
    %1536 = vmatprep.subr.mxu0 0.0
    %1537 = vmatpush1.msra.mxu0 0.0
    %1538 = vmatprep.subr.mxu0 0.0
    %1539 = vmatpush1.msra.mxu0 0.0
    %1540 = vmatprep.subr.mxu0 0.0
    %1541 = vmatpush1.msra.mxu0 0.0
    %1542 = vmatprep.subr.mxu0 0.0
    %1543 = vmatpush1.msra.mxu0 0.0
    %1544 = vmatprep.subr.mxu0 0.0
    %1545 = vmatpush1.msra.mxu0 0.0
    %1546 = vmatprep.subr.mxu0 0.0
    %1547 = vmatpush1.msra.mxu0 0.0
    %1548 = vmatprep.subr.mxu0 0.0
    %1549 = vmatpush1.msra.mxu0 0.0
    %1550 = vmatprep.subr.mxu0 0.0
    %1551 = vmatpush1.msra.mxu0 0.0
    %1552 = vmatprep.subr.mxu0 0.0
    %1553 = vmatpush1.msra.mxu0 %v1520
    %1554 = vmatprep.subr.mxu0 0.0
    %1555 = vmatpush2.msra.mxu0 0.0
    %1556 = vmatprep.subr.mxu0 0.0
    %1557 = vmatpush2.msra.mxu0 0.0
    %1558 = vmatprep.subr.mxu0 0.0
    %1559 = vmatpush2.msra.mxu0 0.0
    %1560 = vmatprep.subr.mxu0 0.0
    %1561 = vmatpush2.msra.mxu0 0.0
    %1562 = vmatprep.subr.mxu0 0.0
    %1563 = vmatpush2.msra.mxu0 0.0
    %1564 = vmatprep.subr.mxu0 0.0
    %1565 = vmatpush2.msra.mxu0 0.0
    %1566 = vmatprep.subr.mxu0 0.0
    %1567 = vmatpush2.msra.mxu0 0.0
    %1568 = vmatprep.subr.mxu0 0.0
    %1569 = vmatpush2.msra.mxu0 0.0
    %1570 = vmatprep.subr.mxu0 0.0
    %1571 = vmatpush2.msra.mxu0 0.0
    %1572 = vmatprep.subr.mxu0 0.0
    %1573 = vmatpush2.msra.mxu0 0.0
    %1574 = vmatprep.subr.mxu0 0.0
    %1575 = vmatpush2.msra.mxu0 0.0
    %1576 = vmatprep.subr.mxu0 0.0
    %1577 = vmatpush2.msra.mxu0 0.0
    %1578 = vmatprep.subr.mxu0 0.0
    %1579 = vmatpush2.msra.mxu0 0.0
    %1580 = vmatprep.subr.mxu0 0.0
    %1581 = vmatpush2.msra.mxu0 0.0
    %1582 = vmatprep.subr.mxu0 0.0
    %1583 = vmatpush2.msra.mxu0 0.0
    %1584 = vmatprep.subr.mxu0 0.0
    %1585 = vmatpush2.msra.mxu0 0.0
    %1586 = vmatprep.mubr.f32.mxu0 0.0
    %1587 = vmatmul.mubr.f32.gmra.mxu0 %v1516
    %v1588 = vpop.f32.mrf.mxu0
    %v1589 = vadd.f32 %v1512, %v1588
    %v1590 = vpop.f32.mrf.mxu0
    %1591 = vdwg.mxu0
    %v1592 = vsub.f32 0.0, %v1589
    %v1593 = vmul.f32 %v1592, 1.442695
    %v1594 = vpow.pop %v1593
    %v1595 = vadd.f32 %v1594, 1.0
    %v1596 = vrcp.pop %v1595
    %v1597 = vld [vmem:[%s12] sm:$0xff]
    %v1598 = vld [vmem:[%s12 + $0x8] sm:$0xff]
    %v1599 = vld [vmem:[%s12 + $0x10] sm:$0xff]
    %v1600 = vld [vmem:[%s12 + $0x18] sm:$0xff]
    %vm1601 = vcmask 15360
    %v1603 = vsel %vm1601, %v1597, 0
    %v1606 = vsel %vm1601, %v1598, 0
    %v1609 = vsel %vm1601, %v1599, 0
    %v1612 = vsel %vm1601, %v1600, 0
    %vm1614 = vcmask 1041408
    %v1616 = vsel %vm1614, %v1596, 0
    %1618 = vmatprep.subr.mxu0 0.0
    %1619 = vmatpush1.msra.mxu0 0.0
    %1620 = vmatprep.subr.mxu0 0.0
    %1621 = vmatpush1.msra.mxu0 0.0
    %1622 = vmatprep.subr.mxu0 0.0
    %1623 = vmatpush1.msra.mxu0 0.0
    %1624 = vmatprep.subr.mxu0 0.0
    %1625 = vmatpush1.msra.mxu0 0.0
    %1626 = vmatprep.subr.mxu0 0.0
    %1627 = vmatpush1.msra.mxu0 0.0
    %1628 = vmatprep.subr.mxu0 0.0
    %1629 = vmatpush1.msra.mxu0 0.0
    %1630 = vmatprep.subr.mxu0 0.0
    %1631 = vmatpush1.msra.mxu0 0.0
    %1632 = vmatprep.subr.mxu0 0.0
    %1633 = vmatpush1.msra.mxu0 0.0
    %1634 = vmatprep.subr.mxu0 0.0
    %1635 = vmatpush1.msra.mxu0 0.0
    %1636 = vmatprep.subr.mxu0 0.0
    %1637 = vmatpush1.msra.mxu0 0.0
    %1638 = vmatprep.subr.mxu0 0.0
    %1639 = vmatpush1.msra.mxu0 0.0
    %1640 = vmatprep.subr.mxu0 0.0
    %1641 = vmatpush1.msra.mxu0 0.0
    %1642 = vmatprep.subr.mxu0 0.0
    %1643 = vmatpush1.msra.mxu0 0.0
    %1644 = vmatprep.subr.mxu0 0.0
    %1645 = vmatpush1.msra.mxu0 0.0
    %1646 = vmatprep.subr.mxu0 0.0
    %1647 = vmatpush1.msra.mxu0 0.0
    %1648 = vmatprep.subr.mxu0 0.0
    %1649 = vmatpush1.msra.mxu0 %v1616
    %1650 = vmatprep.subr.mxu0 0.0
    %1651 = vmatpush2.msra.mxu0 0.0
    %1652 = vmatprep.subr.mxu0 0.0
    %1653 = vmatpush2.msra.mxu0 0.0
    %1654 = vmatprep.subr.mxu0 0.0
    %1655 = vmatpush2.msra.mxu0 0.0
    %1656 = vmatprep.subr.mxu0 0.0
    %1657 = vmatpush2.msra.mxu0 0.0
    %1658 = vmatprep.subr.mxu0 0.0
    %1659 = vmatpush2.msra.mxu0 0.0
    %1660 = vmatprep.subr.mxu0 0.0
    %1661 = vmatpush2.msra.mxu0 0.0
    %1662 = vmatprep.subr.mxu0 0.0
    %1663 = vmatpush2.msra.mxu0 0.0
    %1664 = vmatprep.subr.mxu0 0.0
    %1665 = vmatpush2.msra.mxu0 0.0
    %1666 = vmatprep.subr.mxu0 0.0
    %1667 = vmatpush2.msra.mxu0 0.0
    %1668 = vmatprep.subr.mxu0 0.0
    %1669 = vmatpush2.msra.mxu0 0.0
    %1670 = vmatprep.subr.mxu0 0.0
    %1671 = vmatpush2.msra.mxu0 0.0
    %1672 = vmatprep.subr.mxu0 0.0
    %1673 = vmatpush2.msra.mxu0 0.0
    %1674 = vmatprep.subr.mxu0 0.0
    %1675 = vmatpush2.msra.mxu0 0.0
    %1676 = vmatprep.subr.mxu0 0.0
    %1677 = vmatpush2.msra.mxu0 0.0
    %1678 = vmatprep.subr.mxu0 0.0
    %1679 = vmatpush2.msra.mxu0 0.0
    %1680 = vmatprep.subr.mxu0 0.0
    %1681 = vmatpush2.msra.mxu0 0.0
    %1682 = vmatprep.mubr.f32.mxu0 0.0
    %1683 = vmatmul.mubr.f32.gmra.mxu0 %v1603
    %v1684 = vpop.f32.mrf.mxu0
    %v1685 = vadd.f32 0.0, %v1684
    %v1686 = vpop.f32.mrf.mxu0
    %1687 = vmatprep.mubr.f32.mxu0 0.0
    %1688 = vmatmul.mubr.f32.gmra.mxu0 %v1606
    %v1689 = vpop.f32.mrf.mxu0
    %v1690 = vadd.f32 0.0, %v1689
    %v1691 = vpop.f32.mrf.mxu0
    %1692 = vmatprep.mubr.f32.mxu0 0.0
    %1693 = vmatmul.mubr.f32.gmra.mxu0 %v1609
    %v1694 = vpop.f32.mrf.mxu0
    %v1695 = vadd.f32 0.0, %v1694
    %v1696 = vpop.f32.mrf.mxu0
    %1697 = vmatprep.mubr.f32.mxu0 0.0
    %1698 = vmatmul.mubr.f32.gmra.mxu0 %v1612
    %v1699 = vpop.f32.mrf.mxu0
    %v1700 = vadd.f32 0.0, %v1699
    %v1701 = vpop.f32.mrf.mxu0
    %1702 = vdwg.mxu0
    %v1703 = vmul.f32 %v1334, %v1685
    %v1704 = vmul.f32 %v1335, %v1690
    %v1705 = vmul.f32 %v1336, %v1695
    %v1706 = vmul.f32 %v1337, %v1700
    %v1707 = vadd.f32 %v1703, %v277
    %v1708 = vadd.f32 %v1704, %v282
    %v1709 = vadd.f32 %v1705, %v287
    %v1710 = vadd.f32 %v1706, %v292
    %1711 = vst [vmem:[#allocation7] sm:$0xff] %v1707
    %1712 = vst [vmem:[#allocation7 + $0x8] sm:$0xff] %v1708
    %1713 = vst [vmem:[#allocation7 + $0x10] sm:$0xff] %v1709
    %1714 = vst [vmem:[#allocation7 + $0x18] sm:$0xff] %v1710
    // Predicated region
    $region78: #{tpu_custom_call.1} parent=1 // pred_check
      _
    $region79: #{tpu_custom_call.1} parent=1 // pred_check_branch
      %1716 = sbr.rel (0) target = $region81
    $region80: #{tpu_custom_call.1} parent=1 // pred_region
      %s1718 = ssub.s32 512, 512
      %1719 = vsyncadd [#allocation4], %s1718
      %s1720 = sshll.u32 [#allocation7], 4
      %s1721 = int_to_ptr.vmem [resolvable:$true] %s1720
      %1726 = dma.vmem_to_hbm [thread:$0]  %s1721, 512, %s17, [#allocation4], 128, 128, 8
    $region81: #{tpu_custom_call.1} parent=1 // pred_fallthru
      _
    // Predicated region
    $region82: #{tpu_custom_call.1} parent=1 // pred_check
      _
    $region83: #{tpu_custom_call.1} parent=1 // pred_check_branch
      %1728 = sbr.rel (0) target = $region85
    $region84: #{tpu_custom_call.1} parent=1 // pred_region
      %1729 = dma.done [#allocation4], 512
    $region85: #{tpu_custom_call.1} parent=1 // pred_fallthru
      _
    %1730 = vsyncpa [#allocation3], 1
    %1731 = vsyncpa [#allocation6], 1
    %1732 = vsyncpa [#allocation4], 1

</llo_original>
